<compile_context>
chip_gen: v7x
topology: tpu7x:2x2x1
jax: 0.10.0
libtpu: 0.0.40
codegen_flags: <defaults>
</compile_context>

<pallas_src>
import functools
import math

import numpy as np
import jax
import jax.numpy as jnp
from jax import lax
from jax.experimental import pallas as pl
from jax.experimental.pallas import tpu as pltpu


# ---------------------------------------------------------------------------
# Hardware-aware sizing helpers
# ---------------------------------------------------------------------------
@functools.lru_cache(maxsize=None)
def _vmem_capacity_bytes():
    try:
        info = pltpu.get_tpu_info()
        cap = getattr(info, "vmem_capacity_bytes", None)
        if cap:
            return int(cap)
    except Exception:
        pass
    return 64 << 20          # conservative (v7x-sized) default, safe everywhere


def _block_byte_target():
    # Per-input-block budget: big enough to amortize the ~0.35us/step grid overhead,
    # small enough that 2 buffers x inputs + outputs + f32 intermediates stay well
    # inside VMEM on every generation (v7x has only 64 MiB).
    cap = _vmem_capacity_bytes()
    return int(min(6 << 20, max(2 << 20, cap // 24)))


def _vmem_limit_bytes():
    cap = _vmem_capacity_bytes()
    return int(min(96 << 20, cap * 3 // 4))


@functools.lru_cache(maxsize=None)
def _num_tensorcores():
    # Best-effort TensorCore count (2 on v7x).  Fallback 2: on 1-TC chips the extra
    # leading grid step is a cheap outer loop and duplicated blocks are masked out.
    try:
        dev = jax.devices()[0]
        for attr in ("num_cores", "core_count", "num_tensorcores"):
            v = getattr(dev, attr, None)
            if isinstance(v, int) and v > 0:
                return max(1, min(int(v), 2))
    except Exception:
        pass
    return 2


def _pick_row_tile(rows, padded_row_bytes, target_bytes, max_rows=8192):
    t = target_bytes // max(int(padded_row_bytes), 1)
    t = max(8, min(t, max_rows))
    t = (t // 8) * 8
    if t >= rows:
        return rows          # single block (full dim allowed even if rows % 8 != 0)
    return t


def _round_row_tile(tile_r, rows):
    tile_r = min(int(tile_r), rows)
    if tile_r < rows:
        tile_r = max(8, (tile_r // 8) * 8)
    return tile_r


# ---------------------------------------------------------------------------
# Kernel 1: per-patch pixel normalization  (x - mean) / (sqrt(unbiased var) + 1e-6)
#   G whole patches are packed per block row so the block lane width G*patch_dim is a
#   multiple of 128 whenever feasible (lane-dense DMA + VMEM buffers).
# ---------------------------------------------------------------------------
def _pick_group(n_patch, patch_dim):
    if patch_dim % 128 == 0:
        return 1
    g = 128 // math.gcd(patch_dim, 128)     # smallest G with (G * patch_dim) % 128 == 0
    if g <= 16 and n_patch % g == 0:
        return g
    return 1                                # lane-padded fallback (util already >= ~84%)


def _make_norm_kernel(G, pd):
    inv_pd = 1.0 / pd
    inv_pdm1 = 1.0 / max(pd - 1, 1)         # unbiased (ddof=1), matches torch var

    def kernel(x_ref, o_ref):
        x = x_ref[...].astype(jnp.float32)   # (tile_r, G*pd), cast in-register
        for g in range(G):                   # static unroll, G <= 16
            lo, hi = g * pd, (g + 1) * pd
            xg = x[:, lo:hi]
            mean = jnp.sum(xg, axis=-1, keepdims=True) * inv_pd
            c = xg - mean
            var = jnp.sum(c * c, axis=-1, keepdims=True) * inv_pdm1
            inv = 1.0 / (jnp.sqrt(var) + 1e-6)     # one reciprocal per patch row
            o_ref[:, lo:hi] = (c * inv).astype(o_ref.dtype)

    return kernel


def normalize_patches(x, *, tile_r=None):
    """x: (..., n_patch, patch_dim) -> per-patch normalized, same shape/dtype."""
    *lead, n_patch, pd = (int(v) for v in x.shape)
    G = _pick_group(n_patch, pd)
    tc = G * pd
    rows = int(np.prod(lead)) * n_patch // G
    xf = x.reshape(rows, tc)                 # pure metadata reshape (contiguous)

    itemsize = np.dtype(x.dtype).itemsize    # true itemsize (bf16 -> 2)
    padded_tc = pl.cdiv(tc, 128) * 128
    if tile_r is None:
        tile_r = _pick_row_tile(rows, padded_tc * itemsize, _block_byte_target())
    else:
        tile_r = _round_row_tile(tile_r, rows)

    out = pl.pallas_call(
        _make_norm_kernel(G, pd),
        out_shape=jax.ShapeDtypeStruct((rows, tc), x.dtype),
        grid_spec=pltpu.PrefetchScalarGridSpec(
            num_scalar_prefetch=0,
            grid=(pl.cdiv(rows, tile_r),),   # partial last block handled by Pallas
            in_specs=[pl.BlockSpec((tile_r, tc), lambda i: (i, 0))],
            out_specs=pl.BlockSpec((tile_r, tc), lambda i: (i, 0)),
        ),
        compiler_params=pltpu.CompilerParams(
            dimension_semantics=("parallel",),
            vmem_limit_bytes=_vmem_limit_bytes()),
    )(xf)
    return out.reshape(x.shape)


# ---------------------------------------------------------------------------
# Shared row partitioning for the loss kernels (per-core partials)
# ---------------------------------------------------------------------------
def _row_partition(rows, tile_r):
    rt = pl.cdiv(rows, tile_r)
    nc = max(1, min(_num_tensorcores(), rt))
    rpc = pl.cdiv(rt, nc)
    need_row_mask = nc * rpc * tile_r != rows
    if nc * rpc > rt:
        def rowblk(cc, ri):
            # Clamped duplicate blocks contribute zero through the in-kernel row mask.
            return jnp.minimum(cc * rpc + ri, rt - 1)
    else:
        def rowblk(cc, ri):
            return cc * rpc + ri
    return nc, rpc, need_row_mask, rowblk


# ---------------------------------------------------------------------------
# Kernel 2: masked MSE loss (2-D tiled streaming reduction)
#   loss = ratio * sum((pred - target)^2 * mask_row) / (D * sum(mask)),
#   D = n_patch * patch_dim.  Per-core partials, (8,128) f32 vector accumulator.
# ---------------------------------------------------------------------------
def _make_loss_kernel(rows, D, tr, tc, rpc, ct, need_row_mask, need_col_mask):
    aligned = (tr % 8 == 0) and (tc % 128 == 0)

    def kernel(p_ref, t_ref, m_ref, out_ref, acc_ref):
        cc = pl.program_id(0)          # core-partition axis ("parallel")
        ri = pl.program_id(1)          # row-tile axis ("arbitrary")
        ci = pl.program_id(2)          # feature-tile axis ("arbitrary")

        @pl.when(jnp.logical_and(ri == 0, ci == 0))
        def _init():
            acc_ref[...] = jnp.zeros_like(acc_ref)
            out_ref[...] = jnp.zeros_like(out_ref)

        diff = p_ref[...].astype(jnp.float32) - t_ref[...].astype(jnp.float32)
        sq = diff * diff * m_ref[...]          # (tr, tc) * (tr, 1) lane-broadcast
        # Boundary masking AFTER the arithmetic and as a select: NaN/Inf from
        # Pallas-padded garbage cannot propagate into kept rows/columns.
        if need_col_mask:
            col = lax.broadcasted_iota(jnp.int32, (1, tc), 1) + ci * tc
            sq = jnp.where(col < D, sq, 0.0)
        if need_row_mask:
            row = lax.broadcasted_iota(jnp.int32, (tr, 1), 0) + (cc * rpc + ri) * tr
            sq = jnp.where(row < rows, sq, 0.0)

        if aligned:
            # Vector partial sums only: vreg-wise adds down to one (8,128) tile.
            part = sq.reshape(tr, tc // 128, 128).sum(axis=1)     # (tr, 128)
            part = part.reshape(tr // 8, 8, 128).sum(axis=0)      # (8, 128)
            acc_ref[...] += part
        else:
            # Small / oddly-shaped fallback (tiny inputs only).
            acc_ref[0:1, 0:1] += jnp.sum(sq).reshape(1, 1)

        @pl.when(jnp.logical_and(ri == rpc - 1, ci == ct - 1))
        def _fin():
            out_ref[...] = acc_ref[...].reshape(1, 8, 128)

    return kernel


def masked_mse_loss(preds, targets, loss_mask, fwd_loss_ratio, *, tile_r=None, tile_c=None):
    b, s, c = loss_mask.shape[:3]
    rows = int(b * s * c)
    D = int(preds.shape[-2] * preds.shape[-1])      # n_patch * patch_dim

    # No wrapper-side f32 cast of the big tensors (cast happens in-register).
    pf = preds.reshape(rows, D)
    tf = targets.reshape(rows, D)
    mf = loss_mask.reshape(rows, 1).astype(jnp.float32)     # tiny, cheap to cast

    # Feature tiling: whole row if small, else wide 128-aligned chunks for long bursts.
    if tile_c is None:
        tile_c = D if D <= 8192 else 8192
    tile_c = min(int(tile_c), D)
    if tile_c != D:
        tile_c = max(128, (tile_c // 128) * 128)

    itemsize = max(np.dtype(preds.dtype).itemsize, np.dtype(targets.dtype).itemsize)
    padded_tc = pl.cdiv(tile_c, 128) * 128
    if tile_r is None:
        tile_r = _pick_row_tile(rows, padded_tc * itemsize, _block_byte_target())
    else:
        tile_r = _round_row_tile(tile_r, rows)

    ct = pl.cdiv(D, tile_c)
    nc, rpc, need_row_mask, rowblk = _row_partition(rows, tile_r)
    need_col_mask = ct * tile_c != D

    kernel = _make_loss_kernel(rows, D, tile_r, tile_c, rpc, ct,
                               need_row_mask, need_col_mask)

    out = pl.pallas_call(
        kernel,
        out_shape=jax.ShapeDtypeStruct((nc, 8, 128), jnp.float32),
        grid_spec=pltpu.PrefetchScalarGridSpec(
            num_scalar_prefetch=0,
            grid=(nc, rpc, ct),
            in_specs=[
                pl.BlockSpec((tile_r, tile_c), lambda cc, ri, ci: (rowblk(cc, ri), ci)),
                pl.BlockSpec((tile_r, tile_c), lambda cc, ri, ci: (rowblk(cc, ri), ci)),
                pl.BlockSpec((tile_r, 1), lambda cc, ri, ci: (rowblk(cc, ri), 0)),
            ],
            out_specs=pl.BlockSpec((1, 8, 128), lambda cc, ri, ci: (cc, 0, 0)),
            scratch_shapes=[pltpu.VMEM((8, 128), jnp.float32)],
        ),
        compiler_params=pltpu.CompilerParams(
            dimension_semantics=("parallel", "arbitrary", "arbitrary"),
            vmem_limit_bytes=_vmem_limit_bytes()),
    )(pf, tf, mf)

    num = jnp.sum(out)
    den = jnp.sum(loss_mask.astype(jnp.float32))    # matches torch: no zero-guard
    return fwd_loss_ratio * num / (jnp.float32(D) * den)


# ---------------------------------------------------------------------------
# Kernel 3 (fused): masked MSE loss against per-patch-normalized raw targets.
#   Removes one full HBM write + read of the targets tensor.  Feature tiles are
#   whole multiples of patch_dim so patch statistics never cross a block.
# ---------------------------------------------------------------------------
def _pick_patch_tile(n_patch, pd, max_lanes=4096, max_unroll=32):
    cap = max(1, min(max_lanes // max(pd, 1), max_unroll, n_patch))
    for k in range(cap, 0, -1):
        if n_patch % k == 0:
            return k
    return 1


def _make_fused_loss_kernel(rows, tr, npc, pd, rpc, ct, need_row_mask):
    inv_pd = 1.0 / pd
    inv_pdm1 = 1.0 / max(pd - 1, 1)

    def kernel(p_ref, t_ref, m_ref, out_ref, acc_ref):
        cc = pl.program_id(0)
        ri = pl.program_id(1)
        ci = pl.program_id(2)

        @pl.when(jnp.logical_and(ri == 0, ci == 0))
        def _init():
            acc_ref[...] = jnp.zeros_like(acc_ref)
            out_ref[...] = jnp.zeros_like(out_ref)

        p = p_ref[...].astype(jnp.float32)     # (tr, npc*pd)
        t = t_ref[...].astype(jnp.float32)     # raw patchified targets
        acc2d = None
        for g in range(npc):                    # static unroll, npc <= 32
            lo, hi = g * pd, (g + 1) * pd
            tg = t[:, lo:hi]
            mean = jnp.sum(tg, axis=-1, keepdims=True) * inv_pd
            cvec = tg - mean
            var = jnp.sum(cvec * cvec, axis=-1, keepdims=True) * inv_pdm1
            tn = cvec * (1.0 / (jnp.sqrt(var) + 1e-6))
            d = p[:, lo:hi] - tn
            d2 = d * d
            acc2d = d2 if acc2d is None else acc2d + d2

        sq_rows = jnp.sum(acc2d, axis=-1, keepdims=True) * m_ref[...]   # (tr, 1)
        if need_row_mask:
            row = lax.broadcasted_iota(jnp.int32, (tr, 1), 0) + (cc * rpc + ri) * tr
            sq_rows = jnp.where(row < rows, sq_rows, 0.0)               # select, not mul
        acc_ref[0:1, 0:1] += jnp.sum(sq_rows).reshape(1, 1)             # tiny per-step reduce

        @pl.when(jnp.logical_and(ri == rpc - 1, ci == ct - 1))
        def _fin():
            out_ref[...] = acc_ref[...].reshape(1, 8, 128)

    return kernel


def fused_norm_masked_mse_loss(preds, targets_raw, loss_mask, fwd_loss_ratio, *,
                               tile_r=None, normalize=True):
    """Loss of `preds` vs per-patch-normalized `targets_raw` (b,s,chunk,n_patch,patch_dim)
    without materializing the normalized targets in HBM."""
    if not normalize:
        return masked_mse_loss(preds, targets_raw, loss_mask, fwd_loss_ratio, tile_r=tile_r)

    b, s, c, n_patch, pd = (int(v) for v in targets_raw.shape)
    rows = b * s * c
    D = n_patch * pd
    npc = _pick_patch_tile(n_patch, pd)
    tile_c = npc * pd
    ct = D // tile_c                           # exact: npc divides n_patch

    pf = preds.reshape(rows, D)
    tf = targets_raw.reshape(rows, D)
    mf = loss_mask.reshape(rows, 1).astype(jnp.float32)

    itemsize = max(np.dtype(preds.dtype).itemsize, np.dtype(targets_raw.dtype).itemsize)
    padded_tc = pl.cdiv(tile_c, 128) * 128
    if tile_r is None:
        tile_r = _pick_row_tile(rows, padded_tc * itemsize, _block_byte_target())
    else:
        tile_r = _round_row_tile(tile_r, rows)

    nc, rpc, need_row_mask, rowblk = _row_partition(rows, tile_r)
    kernel = _make_fused_loss_kernel(rows, tile_r, npc, pd, rpc, ct, need_row_mask)

    out = pl.pallas_call(
        kernel,
        out_shape=jax.ShapeDtypeStruct((nc, 8, 128), jnp.float32),
        grid_spec=pltpu.PrefetchScalarGridSpec(
            num_scalar_prefetch=0,
            grid=(nc, rpc, ct),
            in_specs=[
                pl.BlockSpec((tile_r, tile_c), lambda cc, ri, ci: (rowblk(cc, ri), ci)),
                pl.BlockSpec((tile_r, tile_c), lambda cc, ri, ci: (rowblk(cc, ri), ci)),
                pl.BlockSpec((tile_r, 1), lambda cc, ri, ci: (rowblk(cc, ri), 0)),
            ],
            out_specs=pl.BlockSpec((1, 8, 128), lambda cc, ri, ci: (cc, 0, 0)),
            scratch_shapes=[pltpu.VMEM((8, 128), jnp.float32)],
        ),
        compiler_params=pltpu.CompilerParams(
            dimension_semantics=("parallel", "arbitrary", "arbitrary"),
            vmem_limit_bytes=_vmem_limit_bytes()),
    )(pf, tf, mf)

    num = jnp.sum(out)
    den = jnp.sum(loss_mask.astype(jnp.float32))
    return fwd_loss_ratio * num / (jnp.float32(D) * den)


# ---------------------------------------------------------------------------
# Patchify (plain-JAX glue: one XLA transpose pass)
# ---------------------------------------------------------------------------
def _patchify(obs_target, patch_size, chunk_size):
    b, s, _, _, h, w = obs_target.shape
    p = patch_size
    h_p, w_p = h // p, w // p
    x = obs_target.reshape(b, s, chunk_size, 3, h_p, p, w_p, p)
    x = jnp.transpose(x, (0, 1, 2, 4, 6, 5, 7, 3))
    return x.reshape(b, s, chunk_size, h_p * w_p, p * p * 3)


# ---------------------------------------------------------------------------
# Module wrapper (no learnable parameters in __init__ of the reference module)
# ---------------------------------------------------------------------------
class RGBForwardPredHead:
    def __init__(self, image_size, patch_size, hidden_size, fwd_loss_ratio=1.0,
                 chunk_size=1, without_norm_pix_loss=False):
        self.image_size = image_size
        self.patch_size = patch_size
        self.n_patch = (image_size // patch_size) ** 2
        self.hidden_size = hidden_size
        self.fwd_loss_ratio = fwd_loss_ratio
        self.chunk_size = chunk_size
        self.without_norm_pix_loss = without_norm_pix_loss

    def get_targets(self, obs_target):
        # obs_target: (B, S, chunk, 3, H, W)
        x = _patchify(obs_target, self.patch_size, self.chunk_size)
        if not self.without_norm_pix_loss:
            x = normalize_patches(x)
        return x

    def loss(self, preds, targets, loss_mask):
        assert preds.shape[:3] == targets.shape[:3] == loss_mask.shape[:3]
        return masked_mse_loss(preds, targets, loss_mask, self.fwd_loss_ratio)

    def targets_and_loss(self, obs_target, preds, loss_mask):
        """Fused fast path, numerically equivalent to
        loss(preds, get_targets(obs_target), loss_mask) but the target normalization
        happens inside the loss kernel (one fewer HBM write + read of targets)."""
        x = _patchify(obs_target, self.patch_size, self.chunk_size)
        assert preds.shape[:3] == x.shape[:3] == loss_mask.shape[:3]
        return fused_norm_masked_mse_loss(
            preds, x, loss_mask, self.fwd_loss_ratio,
            normalize=not self.without_norm_pix_loss)


# ---------------------------------------------------------------------------
# Pure-JAX reference for verification
# ---------------------------------------------------------------------------
def _ref_get_targets(obs_target, patch_size, chunk_size, without_norm):
    x = _patchify(obs_target, patch_size, chunk_size)
    if not without_norm:
        mean = x.mean(-1, keepdims=True)
        var = x.var(-1, ddof=1, keepdims=True)
        x = (x - mean) / (jnp.sqrt(var) + 1e-6)
    return x


def _ref_loss(preds, targets, loss_mask, ratio):
    l = jnp.mean((preds - targets) ** 2, axis=(-1, -2)) * loss_mask
    return ratio * jnp.sum(l) / jnp.sum(loss_mask.astype(jnp.float32))


if __name__ == "__main__":
    # Small shapes consistent with the module.
    image_size, patch_size, hidden_size = 16, 4, 32
    chunk_size, batch, seq = 1, 2, 8
    head = RGBForwardPredHead(image_size, patch_size, hidden_size,
                              fwd_loss_ratio=1.0, chunk_size=chunk_size)

    key = jax.random.PRNGKey(0)
    k1, k2, k3 = jax.random.split(key, 3)
    obs_target = jax.random.normal(
        k1, (batch, seq, chunk_size, 3, image_size, image_size), jnp.float32)
    preds = jax.random.normal(
        k2, (batch, seq, chunk_size, head.n_patch, patch_size * patch_size * 3), jnp.float32)
    loss_mask = (jax.random.uniform(k3, (batch, seq, chunk_size)) > 0.3).astype(jnp.float32)
    loss_mask = loss_mask.at[0, 0, 0].set(1.0)   # guarantee non-zero denominator

    # Default (auto-tiled) paths.
    targets = head.get_targets(obs_target)
    loss = head.loss(preds, targets, loss_mask)
    loss_fused = head.targets_and_loss(obs_target, preds, loss_mask)
    jax.block_until_ready((targets, loss, loss_fused))

    ref_targets = _ref_get_targets(obs_target, patch_size, chunk_size, False)
    ref_loss = _ref_loss(preds, ref_targets, loss_mask, 1.0)

    assert targets.shape == (batch, seq, chunk_size, head.n_patch,
                             patch_size * patch_size * 3)
    np.testing.assert_allclose(np.asarray(targets), np.asarray(ref_targets),
                               rtol=1e-5, atol=1e-5)
    np.testing.assert_allclose(np.asarray(loss), np.asarray(ref_loss),
                               rtol=1e-5, atol=1e-5)
    np.testing.assert_allclose(np.asarray(loss_fused), np.asarray(ref_loss),
                               rtol=1e-5, atol=1e-5)

    # Extra coverage with forced small tiles: multi-step grids, a partial boundary
    # row block in the norm kernel, feature-dim tiling + column masking and the
    # per-core partial accumulators in the loss kernel.
    x_patch = _patchify(obs_target, patch_size, chunk_size)
    t_small = normalize_patches(x_patch, tile_r=24)        # 32 grouped rows -> partial block
    np.testing.assert_allclose(np.asarray(t_small), np.asarray(ref_targets),
                               rtol=1e-5, atol=1e-5)

    loss_small = masked_mse_loss(preds, targets, loss_mask, 1.0, tile_r=8, tile_c=512)
    np.testing.assert_allclose(np.asarray(loss_small), np.asarray(ref_loss),
                               rtol=1e-5, atol=1e-5)

    # Row counts that do not divide the row tile: exercises the row mask, the scalar
    # fallback reduction and the fused kernel on partial row blocks.
    preds2 = preds[:, :5]
    mask2 = loss_mask[:, :5]
    obs2 = obs_target[:, :5]
    ref_t2 = _ref_get_targets(obs2, patch_size, chunk_size, False)
    ref_l2 = _ref_loss(preds2, ref_t2, mask2, 1.0)
    t2 = head.get_targets(obs2)
    l2_default = head.loss(preds2, t2, mask2)                        # full block, rows % 8 != 0
    l2_tiled = masked_mse_loss(preds2, t2, mask2, 1.0, tile_r=8)     # partial row block + mask
    l2_fused = fused_norm_masked_mse_loss(
        preds2, _patchify(obs2, patch_size, chunk_size), mask2, 1.0, tile_r=8)
    jax.block_until_ready((t2, l2_default, l2_tiled, l2_fused))
    np.testing.assert_allclose(np.asarray(t2), np.asarray(ref_t2), rtol=1e-5, atol=1e-5)
    for l in (l2_default, l2_tiled, l2_fused):
        np.testing.assert_allclose(np.asarray(l), np.asarray(ref_l2), rtol=1e-5, atol=1e-5)

    # Odd number of row blocks: exercises the clamped duplicate-block path when the
    # per-core split does not divide the row-block count.
    preds3 = jnp.concatenate([preds, preds[:, :1]], axis=1)
    targets3 = jnp.concatenate([targets, targets[:, :1]], axis=1)
    mask3 = jnp.concatenate([loss_mask, loss_mask[:, :1]], axis=1)
    ref_l3 = _ref_loss(preds3, targets3, mask3, 1.0)
    l3 = masked_mse_loss(preds3, targets3, mask3, 1.0, tile_r=8)
    np.testing.assert_allclose(np.asarray(l3), np.asarray(ref_l3), rtol=1e-5, atol=1e-5)

    print("KERNEL_OK")
</pallas_src>

<mosaic_0001>
module attributes {stable_mosaic.version = 11 : i64} {
  func.func @kernel(%arg0: i32, %arg1: memref<32x384xf32, #tpu.memory_space<vmem>>, %arg2: memref<32x384xf32, #tpu.memory_space<vmem>>) attributes {dimension_semantics = [#tpu.dimension_semantics<parallel>], iteration_bounds = array<i64: 1>, scalar_prefetch = 0 : i64, scratch_operands = 0 : i64, tpu.core_type = #tpu.core_type<tc>, window_params = [{transform_indices = @transform_0, window_bounds = array<i64: 32, 384>}, {transform_indices = @transform_1, window_bounds = array<i64: 32, 384>}]} {
    %c0 = arith.constant 0 : index
    %c0_0 = arith.constant 0 : index
    %0 = vector.load %arg1[%c0, %c0_0] : memref<32x384xf32, #tpu.memory_space<vmem>>, vector<32x384xf32>
    %1 = vector.extract_strided_slice %0 {offsets = [0, 0], sizes = [32, 48], strides = [1, 1]} : vector<32x384xf32> to vector<32x48xf32>
    %cst = arith.constant dense<0.000000e+00> : vector<32xf32>
    %2 = vector.multi_reduction <add>, %1, %cst [1] : vector<32x48xf32> to vector<32xf32>
    %3 = vector.shape_cast %2 : vector<32xf32> to vector<32x1xf32>
    %cst_1 = arith.constant 0.020833334 : f32
    %4 = vector.broadcast %cst_1 : f32 to vector<32x1xf32>
    %5 = arith.mulf %3, %4 : vector<32x1xf32>
    %6 = vector.broadcast %5 : vector<32x1xf32> to vector<32x48xf32>
    %7 = arith.subf %1, %6 : vector<32x48xf32>
    %8 = arith.mulf %7, %7 : vector<32x48xf32>
    %cst_2 = arith.constant dense<0.000000e+00> : vector<32xf32>
    %9 = vector.multi_reduction <add>, %8, %cst_2 [1] : vector<32x48xf32> to vector<32xf32>
    %10 = vector.shape_cast %9 : vector<32xf32> to vector<32x1xf32>
    %cst_3 = arith.constant 0.0212765951 : f32
    %11 = vector.broadcast %cst_3 : f32 to vector<32x1xf32>
    %12 = arith.mulf %10, %11 : vector<32x1xf32>
    %13 = math.sqrt %12 : vector<32x1xf32>
    %cst_4 = arith.constant 9.99999997E-7 : f32
    %14 = vector.broadcast %cst_4 : f32 to vector<32x1xf32>
    %15 = arith.addf %13, %14 : vector<32x1xf32>
    %cst_5 = arith.constant 1.000000e+00 : f32
    %16 = vector.broadcast %cst_5 : f32 to vector<32x1xf32>
    %17 = arith.divf %16, %15 : vector<32x1xf32>
    %18 = vector.broadcast %17 : vector<32x1xf32> to vector<32x48xf32>
    %19 = arith.mulf %7, %18 : vector<32x48xf32>
    %c0_6 = arith.constant 0 : index
    %c0_7 = arith.constant 0 : index
    %20 = vector.load %arg2[%c0_6, %c0_7] : memref<32x384xf32, #tpu.memory_space<vmem>>, vector<32x48xf32>
    tpu.vector_store %arg2[%c0_6, %c0_7], %19 {strides = array<i32>} : memref<32x384xf32, #tpu.memory_space<vmem>>, vector<32x48xf32>,
    %21 = vector.extract_strided_slice %0 {offsets = [0, 48], sizes = [32, 48], strides = [1, 1]} : vector<32x384xf32> to vector<32x48xf32>
    %cst_8 = arith.constant dense<0.000000e+00> : vector<32xf32>
    %22 = vector.multi_reduction <add>, %21, %cst_8 [1] : vector<32x48xf32> to vector<32xf32>
    %23 = vector.shape_cast %22 : vector<32xf32> to vector<32x1xf32>
    %cst_9 = arith.constant 0.020833334 : f32
    %24 = vector.broadcast %cst_9 : f32 to vector<32x1xf32>
    %25 = arith.mulf %23, %24 : vector<32x1xf32>
    %26 = vector.broadcast %25 : vector<32x1xf32> to vector<32x48xf32>
    %27 = arith.subf %21, %26 : vector<32x48xf32>
    %28 = arith.mulf %27, %27 : vector<32x48xf32>
    %cst_10 = arith.constant dense<0.000000e+00> : vector<32xf32>
    %29 = vector.multi_reduction <add>, %28, %cst_10 [1] : vector<32x48xf32> to vector<32xf32>
    %30 = vector.shape_cast %29 : vector<32xf32> to vector<32x1xf32>
    %cst_11 = arith.constant 0.0212765951 : f32
    %31 = vector.broadcast %cst_11 : f32 to vector<32x1xf32>
    %32 = arith.mulf %30, %31 : vector<32x1xf32>
    %33 = math.sqrt %32 : vector<32x1xf32>
    %cst_12 = arith.constant 9.99999997E-7 : f32
    %34 = vector.broadcast %cst_12 : f32 to vector<32x1xf32>
    %35 = arith.addf %33, %34 : vector<32x1xf32>
    %cst_13 = arith.constant 1.000000e+00 : f32
    %36 = vector.broadcast %cst_13 : f32 to vector<32x1xf32>
    %37 = arith.divf %36, %35 : vector<32x1xf32>
    %38 = vector.broadcast %37 : vector<32x1xf32> to vector<32x48xf32>
    %39 = arith.mulf %27, %38 : vector<32x48xf32>
    %c0_14 = arith.constant 0 : index
    %c48 = arith.constant 48 : index
    %40 = vector.load %arg2[%c0_14, %c48] : memref<32x384xf32, #tpu.memory_space<vmem>>, vector<32x48xf32>
    tpu.vector_store %arg2[%c0_14, %c48], %39 {strides = array<i32>} : memref<32x384xf32, #tpu.memory_space<vmem>>, vector<32x48xf32>,
    %41 = vector.extract_strided_slice %0 {offsets = [0, 96], sizes = [32, 48], strides = [1, 1]} : vector<32x384xf32> to vector<32x48xf32>
    %cst_15 = arith.constant dense<0.000000e+00> : vector<32xf32>
    %42 = vector.multi_reduction <add>, %41, %cst_15 [1] : vector<32x48xf32> to vector<32xf32>
    %43 = vector.shape_cast %42 : vector<32xf32> to vector<32x1xf32>
    %cst_16 = arith.constant 0.020833334 : f32
    %44 = vector.broadcast %cst_16 : f32 to vector<32x1xf32>
    %45 = arith.mulf %43, %44 : vector<32x1xf32>
    %46 = vector.broadcast %45 : vector<32x1xf32> to vector<32x48xf32>
    %47 = arith.subf %41, %46 : vector<32x48xf32>
    %48 = arith.mulf %47, %47 : vector<32x48xf32>
    %cst_17 = arith.constant dense<0.000000e+00> : vector<32xf32>
    %49 = vector.multi_reduction <add>, %48, %cst_17 [1] : vector<32x48xf32> to vector<32xf32>
    %50 = vector.shape_cast %49 : vector<32xf32> to vector<32x1xf32>
    %cst_18 = arith.constant 0.0212765951 : f32
    %51 = vector.broadcast %cst_18 : f32 to vector<32x1xf32>
    %52 = arith.mulf %50, %51 : vector<32x1xf32>
    %53 = math.sqrt %52 : vector<32x1xf32>
    %cst_19 = arith.constant 9.99999997E-7 : f32
    %54 = vector.broadcast %cst_19 : f32 to vector<32x1xf32>
    %55 = arith.addf %53, %54 : vector<32x1xf32>
    %cst_20 = arith.constant 1.000000e+00 : f32
    %56 = vector.broadcast %cst_20 : f32 to vector<32x1xf32>
    %57 = arith.divf %56, %55 : vector<32x1xf32>
    %58 = vector.broadcast %57 : vector<32x1xf32> to vector<32x48xf32>
    %59 = arith.mulf %47, %58 : vector<32x48xf32>
    %c0_21 = arith.constant 0 : index
    %c96 = arith.constant 96 : index
    %60 = vector.load %arg2[%c0_21, %c96] : memref<32x384xf32, #tpu.memory_space<vmem>>, vector<32x48xf32>
    tpu.vector_store %arg2[%c0_21, %c96], %59 {strides = array<i32>} : memref<32x384xf32, #tpu.memory_space<vmem>>, vector<32x48xf32>,
    %61 = vector.extract_strided_slice %0 {offsets = [0, 144], sizes = [32, 48], strides = [1, 1]} : vector<32x384xf32> to vector<32x48xf32>
    %cst_22 = arith.constant dense<0.000000e+00> : vector<32xf32>
    %62 = vector.multi_reduction <add>, %61, %cst_22 [1] : vector<32x48xf32> to vector<32xf32>
    %63 = vector.shape_cast %62 : vector<32xf32> to vector<32x1xf32>
    %cst_23 = arith.constant 0.020833334 : f32
    %64 = vector.broadcast %cst_23 : f32 to vector<32x1xf32>
    %65 = arith.mulf %63, %64 : vector<32x1xf32>
    %66 = vector.broadcast %65 : vector<32x1xf32> to vector<32x48xf32>
    %67 = arith.subf %61, %66 : vector<32x48xf32>
    %68 = arith.mulf %67, %67 : vector<32x48xf32>
    %cst_24 = arith.constant dense<0.000000e+00> : vector<32xf32>
    %69 = vector.multi_reduction <add>, %68, %cst_24 [1] : vector<32x48xf32> to vector<32xf32>
    %70 = vector.shape_cast %69 : vector<32xf32> to vector<32x1xf32>
    %cst_25 = arith.constant 0.0212765951 : f32
    %71 = vector.broadcast %cst_25 : f32 to vector<32x1xf32>
    %72 = arith.mulf %70, %71 : vector<32x1xf32>
    %73 = math.sqrt %72 : vector<32x1xf32>
    %cst_26 = arith.constant 9.99999997E-7 : f32
    %74 = vector.broadcast %cst_26 : f32 to vector<32x1xf32>
    %75 = arith.addf %73, %74 : vector<32x1xf32>
    %cst_27 = arith.constant 1.000000e+00 : f32
    %76 = vector.broadcast %cst_27 : f32 to vector<32x1xf32>
    %77 = arith.divf %76, %75 : vector<32x1xf32>
    %78 = vector.broadcast %77 : vector<32x1xf32> to vector<32x48xf32>
    %79 = arith.mulf %67, %78 : vector<32x48xf32>
    %c0_28 = arith.constant 0 : index
    %c144 = arith.constant 144 : index
    %80 = vector.load %arg2[%c0_28, %c144] : memref<32x384xf32, #tpu.memory_space<vmem>>, vector<32x48xf32>
    tpu.vector_store %arg2[%c0_28, %c144], %79 {strides = array<i32>} : memref<32x384xf32, #tpu.memory_space<vmem>>, vector<32x48xf32>,
    %81 = vector.extract_strided_slice %0 {offsets = [0, 192], sizes = [32, 48], strides = [1, 1]} : vector<32x384xf32> to vector<32x48xf32>
    %cst_29 = arith.constant dense<0.000000e+00> : vector<32xf32>
    %82 = vector.multi_reduction <add>, %81, %cst_29 [1] : vector<32x48xf32> to vector<32xf32>
    %83 = vector.shape_cast %82 : vector<32xf32> to vector<32x1xf32>
    %cst_30 = arith.constant 0.020833334 : f32
    %84 = vector.broadcast %cst_30 : f32 to vector<32x1xf32>
    %85 = arith.mulf %83, %84 : vector<32x1xf32>
    %86 = vector.broadcast %85 : vector<32x1xf32> to vector<32x48xf32>
    %87 = arith.subf %81, %86 : vector<32x48xf32>
    %88 = arith.mulf %87, %87 : vector<32x48xf32>
    %cst_31 = arith.constant dense<0.000000e+00> : vector<32xf32>
    %89 = vector.multi_reduction <add>, %88, %cst_31 [1] : vector<32x48xf32> to vector<32xf32>
    %90 = vector.shape_cast %89 : vector<32xf32> to vector<32x1xf32>
    %cst_32 = arith.constant 0.0212765951 : f32
    %91 = vector.broadcast %cst_32 : f32 to vector<32x1xf32>
    %92 = arith.mulf %90, %91 : vector<32x1xf32>
    %93 = math.sqrt %92 : vector<32x1xf32>
    %cst_33 = arith.constant 9.99999997E-7 : f32
    %94 = vector.broadcast %cst_33 : f32 to vector<32x1xf32>
    %95 = arith.addf %93, %94 : vector<32x1xf32>
    %cst_34 = arith.constant 1.000000e+00 : f32
    %96 = vector.broadcast %cst_34 : f32 to vector<32x1xf32>
    %97 = arith.divf %96, %95 : vector<32x1xf32>
    %98 = vector.broadcast %97 : vector<32x1xf32> to vector<32x48xf32>
    %99 = arith.mulf %87, %98 : vector<32x48xf32>
    %c0_35 = arith.constant 0 : index
    %c192 = arith.constant 192 : index
    %100 = vector.load %arg2[%c0_35, %c192] : memref<32x384xf32, #tpu.memory_space<vmem>>, vector<32x48xf32>
    tpu.vector_store %arg2[%c0_35, %c192], %99 {strides = array<i32>} : memref<32x384xf32, #tpu.memory_space<vmem>>, vector<32x48xf32>,
    %101 = vector.extract_strided_slice %0 {offsets = [0, 240], sizes = [32, 48], strides = [1, 1]} : vector<32x384xf32> to vector<32x48xf32>
    %cst_36 = arith.constant dense<0.000000e+00> : vector<32xf32>
    %102 = vector.multi_reduction <add>, %101, %cst_36 [1] : vector<32x48xf32> to vector<32xf32>
    %103 = vector.shape_cast %102 : vector<32xf32> to vector<32x1xf32>
    %cst_37 = arith.constant 0.020833334 : f32
    %104 = vector.broadcast %cst_37 : f32 to vector<32x1xf32>
    %105 = arith.mulf %103, %104 : vector<32x1xf32>
    %106 = vector.broadcast %105 : vector<32x1xf32> to vector<32x48xf32>
    %107 = arith.subf %101, %106 : vector<32x48xf32>
    %108 = arith.mulf %107, %107 : vector<32x48xf32>
    %cst_38 = arith.constant dense<0.000000e+00> : vector<32xf32>
    %109 = vector.multi_reduction <add>, %108, %cst_38 [1] : vector<32x48xf32> to vector<32xf32>
    %110 = vector.shape_cast %109 : vector<32xf32> to vector<32x1xf32>
    %cst_39 = arith.constant 0.0212765951 : f32
    %111 = vector.broadcast %cst_39 : f32 to vector<32x1xf32>
    %112 = arith.mulf %110, %111 : vector<32x1xf32>
    %113 = math.sqrt %112 : vector<32x1xf32>
    %cst_40 = arith.constant 9.99999997E-7 : f32
    %114 = vector.broadcast %cst_40 : f32 to vector<32x1xf32>
    %115 = arith.addf %113, %114 : vector<32x1xf32>
    %cst_41 = arith.constant 1.000000e+00 : f32
    %116 = vector.broadcast %cst_41 : f32 to vector<32x1xf32>
    %117 = arith.divf %116, %115 : vector<32x1xf32>
    %118 = vector.broadcast %117 : vector<32x1xf32> to vector<32x48xf32>
    %119 = arith.mulf %107, %118 : vector<32x48xf32>
    %c0_42 = arith.constant 0 : index
    %c240 = arith.constant 240 : index
    %120 = vector.load %arg2[%c0_42, %c240] : memref<32x384xf32, #tpu.memory_space<vmem>>, vector<32x48xf32>
    tpu.vector_store %arg2[%c0_42, %c240], %119 {strides = array<i32>} : memref<32x384xf32, #tpu.memory_space<vmem>>, vector<32x48xf32>,
    %121 = vector.extract_strided_slice %0 {offsets = [0, 288], sizes = [32, 48], strides = [1, 1]} : vector<32x384xf32> to vector<32x48xf32>
    %cst_43 = arith.constant dense<0.000000e+00> : vector<32xf32>
    %122 = vector.multi_reduction <add>, %121, %cst_43 [1] : vector<32x48xf32> to vector<32xf32>
    %123 = vector.shape_cast %122 : vector<32xf32> to vector<32x1xf32>
    %cst_44 = arith.constant 0.020833334 : f32
    %124 = vector.broadcast %cst_44 : f32 to vector<32x1xf32>
    %125 = arith.mulf %123, %124 : vector<32x1xf32>
    %126 = vector.broadcast %125 : vector<32x1xf32> to vector<32x48xf32>
    %127 = arith.subf %121, %126 : vector<32x48xf32>
    %128 = arith.mulf %127, %127 : vector<32x48xf32>
    %cst_45 = arith.constant dense<0.000000e+00> : vector<32xf32>
    %129 = vector.multi_reduction <add>, %128, %cst_45 [1] : vector<32x48xf32> to vector<32xf32>
    %130 = vector.shape_cast %129 : vector<32xf32> to vector<32x1xf32>
    %cst_46 = arith.constant 0.0212765951 : f32
    %131 = vector.broadcast %cst_46 : f32 to vector<32x1xf32>
    %132 = arith.mulf %130, %131 : vector<32x1xf32>
    %133 = math.sqrt %132 : vector<32x1xf32>
    %cst_47 = arith.constant 9.99999997E-7 : f32
    %134 = vector.broadcast %cst_47 : f32 to vector<32x1xf32>
    %135 = arith.addf %133, %134 : vector<32x1xf32>
    %cst_48 = arith.constant 1.000000e+00 : f32
    %136 = vector.broadcast %cst_48 : f32 to vector<32x1xf32>
    %137 = arith.divf %136, %135 : vector<32x1xf32>
    %138 = vector.broadcast %137 : vector<32x1xf32> to vector<32x48xf32>
    %139 = arith.mulf %127, %138 : vector<32x48xf32>
    %c0_49 = arith.constant 0 : index
    %c288 = arith.constant 288 : index
    %140 = vector.load %arg2[%c0_49, %c288] : memref<32x384xf32, #tpu.memory_space<vmem>>, vector<32x48xf32>
    tpu.vector_store %arg2[%c0_49, %c288], %139 {strides = array<i32>} : memref<32x384xf32, #tpu.memory_space<vmem>>, vector<32x48xf32>,
    %141 = vector.extract_strided_slice %0 {offsets = [0, 336], sizes = [32, 48], strides = [1, 1]} : vector<32x384xf32> to vector<32x48xf32>
    %cst_50 = arith.constant dense<0.000000e+00> : vector<32xf32>
    %142 = vector.multi_reduction <add>, %141, %cst_50 [1] : vector<32x48xf32> to vector<32xf32>
    %143 = vector.shape_cast %142 : vector<32xf32> to vector<32x1xf32>
    %cst_51 = arith.constant 0.020833334 : f32
    %144 = vector.broadcast %cst_51 : f32 to vector<32x1xf32>
    %145 = arith.mulf %143, %144 : vector<32x1xf32>
    %146 = vector.broadcast %145 : vector<32x1xf32> to vector<32x48xf32>
    %147 = arith.subf %141, %146 : vector<32x48xf32>
    %148 = arith.mulf %147, %147 : vector<32x48xf32>
    %cst_52 = arith.constant dense<0.000000e+00> : vector<32xf32>
    %149 = vector.multi_reduction <add>, %148, %cst_52 [1] : vector<32x48xf32> to vector<32xf32>
    %150 = vector.shape_cast %149 : vector<32xf32> to vector<32x1xf32>
    %cst_53 = arith.constant 0.0212765951 : f32
    %151 = vector.broadcast %cst_53 : f32 to vector<32x1xf32>
    %152 = arith.mulf %150, %151 : vector<32x1xf32>
    %153 = math.sqrt %152 : vector<32x1xf32>
    %cst_54 = arith.constant 9.99999997E-7 : f32
    %154 = vector.broadcast %cst_54 : f32 to vector<32x1xf32>
    %155 = arith.addf %153, %154 : vector<32x1xf32>
    %cst_55 = arith.constant 1.000000e+00 : f32
    %156 = vector.broadcast %cst_55 : f32 to vector<32x1xf32>
    %157 = arith.divf %156, %155 : vector<32x1xf32>
    %158 = vector.broadcast %157 : vector<32x1xf32> to vector<32x48xf32>
    %159 = arith.mulf %147, %158 : vector<32x48xf32>
    %c0_56 = arith.constant 0 : index
    %c336 = arith.constant 336 : index
    %160 = vector.load %arg2[%c0_56, %c336] : memref<32x384xf32, #tpu.memory_space<vmem>>, vector<32x48xf32>
    tpu.vector_store %arg2[%c0_56, %c336], %159 {strides = array<i32>} : memref<32x384xf32, #tpu.memory_space<vmem>>, vector<32x48xf32>,
    return
  }
  func.func @transform_0(%arg0: i32) -> (i32, i32) {
    %c0_i32 = arith.constant 0 : i32
    %c0_i32_0 = arith.constant 0 : i32
    return %arg0, %c0_i32 : i32, i32
  }
  func.func @transform_1(%arg0: i32) -> (i32, i32) {
    %c0_i32 = arith.constant 0 : i32
    %c0_i32_0 = arith.constant 0 : i32
    return %arg0, %c0_i32 : i32, i32
  }
}

</mosaic_0001>

<llo_original>
// kernel: tpu_custom_call.1
$region0: #{tpu_custom_call.1}
  #allocation0 [shape = 'u32[]', space=smem, size = 0x4, offset = 0x4, fixed_abs, tag = 'smem constant byte address 0x4 - core index']
  #allocation1 [shape = 'u32[144,128]{1,0:T(1,128)}', space=vmem, size = 0x12000, scoped, tag = 'internal scratch']
  %s0 = inlined_call_operand.hbm [shape: f32[32,384], index: 0, kind: input, shape index: {}]
  %s1 = inlined_call_operand.hbm [shape: f32[32,384], index: 1, kind: output, shape index: {}]
  %s2 = sld [smem:[#allocation0]]
  $region18: #{tpu_custom_call.1} parent=0
    _
  %s4 = ssub.s32 1, %s2
  %s5 = scalar_select 0, %s4, %s2
  $region1: #{tpu_custom_call.1} parent=0
    #allocation2 [shape = 'u8[49152]{0}', space=vmem, size = 0xc000, scoped, tag = 'input window, operand 0, single buffered']
    #allocation3 [shape = 's32[1]{0}', space=sflag, size = 0x4, scoped, tag = 'scoped memory for tpu_custom_call.1']
    #allocation4 [shape = 's32[1]{0}', space=sflag, size = 0x4, scoped, tag = 'scoped memory for tpu_custom_call.1']
    #allocation5 [shape = 'u8[49152]{0}', space=vmem, size = 0xc000, scoped, tag = 'output window, operand 0, single buffered']
    %6 = vsyncpa [#allocation3], 0
    %7 = vsyncpa [#allocation4], 0
    // Predicated region
    $region2: #{tpu_custom_call.1} parent=1 // pred_check
      _
    $region3: #{tpu_custom_call.1} parent=1 // pred_check_branch
      %9 = sbr.rel (0) target = $region5
    $region4: #{tpu_custom_call.1} parent=1 // pred_region
      %s11 = ssub.s32 1536, 1536
      %12 = vsyncadd [#allocation3], %s11
      %s13 = sshll.u32 [#allocation2], 4
      %s14 = int_to_ptr.vmem [resolvable:$true] %s13
      %19 = dma.hbm_to_vmem [thread:$0]  %s0, 1536, %s14, [#allocation3], 384, 384, 24
    $region5: #{tpu_custom_call.1} parent=1 // pred_fallthru
      _
    // Predicated region
    $region6: #{tpu_custom_call.1} parent=1 // pred_check
      _
    $region7: #{tpu_custom_call.1} parent=1 // pred_check_branch
      %21 = sbr.rel (0) target = $region9
    $region8: #{tpu_custom_call.1} parent=1 // pred_region
      %22 = dma.done [#allocation3], 1536
    $region9: #{tpu_custom_call.1} parent=1 // pred_fallthru
      _
    %v23 = vld [vmem:[#allocation2] sm:$0xff]
    %v24 = vld [vmem:[#allocation2 + $0x8] sm:$0xff]
    %v25 = vld [vmem:[#allocation2 + $0x10] sm:$0xff]
    %v26 = vld [vmem:[#allocation2 + $0x18] sm:$0xff]
    %v27 = vld [vmem:[#allocation2 + $0x20] sm:$0xff]
    %v28 = vld [vmem:[#allocation2 + $0x28] sm:$0xff]
    %v29 = vld [vmem:[#allocation2 + $0x30] sm:$0xff]
    %v30 = vld [vmem:[#allocation2 + $0x38] sm:$0xff]
    %v31 = vld [vmem:[#allocation2 + $0x40] sm:$0xff]
    %v32 = vld [vmem:[#allocation2 + $0x48] sm:$0xff]
    %v33 = vld [vmem:[#allocation2 + $0x50] sm:$0xff]
    %v34 = vld [vmem:[#allocation2 + $0x58] sm:$0xff]
    %vm35 = vcmask 392192
    %v36 = vsel %vm35, %v23, 0.0
    %37 = vadd.xlane.f32.xlu0 %v36
    %v38 = vpop.xlane.xlu0 %37
    %v39 = vsel %vm35, %v26, 0.0
    %40 = vadd.xlane.f32.xlu0 %v39
    %v41 = vpop.xlane.xlu0 %40
    %v42 = vsel %vm35, %v29, 0.0
    %43 = vadd.xlane.f32.xlu0 %v42
    %v44 = vpop.xlane.xlu0 %43
    %v45 = vsel %vm35, %v32, 0.0
    %46 = vadd.xlane.f32.xlu0 %v45
    %v47 = vpop.xlane.xlu0 %46
    %v48 = vmul.f32 %v38, 0.020833334
    %v49 = vmul.f32 %v41, 0.020833334
    %v50 = vmul.f32 %v44, 0.020833334
    %v51 = vmul.f32 %v47, 0.020833334
    %v52 = vsub.f32 %v23, %v48
    %v53 = vsub.f32 %v26, %v49
    %v54 = vsub.f32 %v29, %v50
    %v55 = vsub.f32 %v32, %v51
    %v56 = vmul.f32 %v52, %v52
    %v57 = vmul.f32 %v53, %v53
    %v58 = vmul.f32 %v54, %v54
    %v59 = vmul.f32 %v55, %v55
    %v60 = vsel %vm35, %v56, 0.0
    %61 = vadd.xlane.f32.xlu0 %v60
    %v62 = vpop.xlane.xlu0 %61
    %v63 = vsel %vm35, %v57, 0.0
    %64 = vadd.xlane.f32.xlu0 %v63
    %v65 = vpop.xlane.xlu0 %64
    %v66 = vsel %vm35, %v58, 0.0
    %67 = vadd.xlane.f32.xlu0 %v66
    %v68 = vpop.xlane.xlu0 %67
    %v69 = vsel %vm35, %v59, 0.0
    %70 = vadd.xlane.f32.xlu0 %v69
    %v71 = vpop.xlane.xlu0 %70
    %v72 = vmul.f32 %v62, 0.021276595
    %v73 = vmul.f32 %v65, 0.021276595
    %v74 = vmul.f32 %v68, 0.021276595
    %v75 = vmul.f32 %v71, 0.021276595
    %v76 = vrsqrt.pop %v72
    %v77 = vmul.f32 %v72, %v76
    %vm78 = vcmp.eq.f32.partialorder %v72, inf
    %v79 = vsel %vm78, %v72, %v77
    %vm80 = vcmp.eq.f32.partialorder %v72, 0.0
    %v81 = vand.u32 %v72, 2147483648
    %v82 = vsel %vm80, %v81, %v79
    %v83 = vrsqrt.pop %v73
    %v84 = vmul.f32 %v73, %v83
    %vm85 = vcmp.eq.f32.partialorder %v73, inf
    %v86 = vsel %vm85, %v73, %v84
    %vm87 = vcmp.eq.f32.partialorder %v73, 0.0
    %v88 = vand.u32 %v73, 2147483648
    %v89 = vsel %vm87, %v88, %v86
    %v90 = vrsqrt.pop %v74
    %v91 = vmul.f32 %v74, %v90
    %vm92 = vcmp.eq.f32.partialorder %v74, inf
    %v93 = vsel %vm92, %v74, %v91
    %vm94 = vcmp.eq.f32.partialorder %v74, 0.0
    %v95 = vand.u32 %v74, 2147483648
    %v96 = vsel %vm94, %v95, %v93
    %v97 = vrsqrt.pop %v75
    %v98 = vmul.f32 %v75, %v97
    %vm99 = vcmp.eq.f32.partialorder %v75, inf
    %v100 = vsel %vm99, %v75, %v98
    %vm101 = vcmp.eq.f32.partialorder %v75, 0.0
    %v102 = vand.u32 %v75, 2147483648
    %v103 = vsel %vm101, %v102, %v100
    %v104 = vadd.f32 %v82, 1e-06
    %v105 = vadd.f32 %v89, 1e-06
    %v106 = vadd.f32 %v96, 1e-06
    %v107 = vadd.f32 %v103, 1e-06
    %v108 = vrcp.pop %v104
    %v109 = vmul.f32 1.0, %v108
    %v110 = vrcp.pop %v105
    %v111 = vmul.f32 1.0, %v110
    %v112 = vrcp.pop %v106
    %v113 = vmul.f32 1.0, %v112
    %v114 = vrcp.pop %v107
    %v115 = vmul.f32 1.0, %v114
    %v116 = vmul.f32 %v52, %v109
    %v117 = vmul.f32 %v53, %v111
    %v118 = vmul.f32 %v54, %v113
    %v119 = vmul.f32 %v55, %v115
    %120 = vst.msk [vmem:[#allocation5] sm:$0xff] %vm35, %v116
    %121 = vst.msk [vmem:[#allocation5 + $0x18] sm:$0xff] %vm35, %v117
    %122 = vst.msk [vmem:[#allocation5 + $0x30] sm:$0xff] %vm35, %v118
    %123 = vst.msk [vmem:[#allocation5 + $0x48] sm:$0xff] %vm35, %v119
    %128 = vrot.lane.b32.xlu0 %v23, 80
    %v129 = vpop.permute.xlu0 %128
    %130 = vrot.lane.b32.xlu0 %v26, 80
    %v131 = vpop.permute.xlu0 %130
    %132 = vrot.lane.b32.xlu0 %v29, 80
    %v133 = vpop.permute.xlu0 %132
    %134 = vrot.lane.b32.xlu0 %v32, 80
    %v135 = vpop.permute.xlu0 %134
    %v140 = vsel %vm35, %v129, 0.0
    %141 = vadd.xlane.f32.xlu0 %v140
    %v142 = vpop.xlane.xlu0 %141
    %v143 = vsel %vm35, %v131, 0.0
    %144 = vadd.xlane.f32.xlu0 %v143
    %v145 = vpop.xlane.xlu0 %144
    %v146 = vsel %vm35, %v133, 0.0
    %147 = vadd.xlane.f32.xlu0 %v146
    %v148 = vpop.xlane.xlu0 %147
    %v149 = vsel %vm35, %v135, 0.0
    %150 = vadd.xlane.f32.xlu0 %v149
    %v151 = vpop.xlane.xlu0 %150
    %v152 = vmul.f32 %v142, 0.020833334
    %v153 = vmul.f32 %v145, 0.020833334
    %v154 = vmul.f32 %v148, 0.020833334
    %v155 = vmul.f32 %v151, 0.020833334
    %v156 = vsub.f32 %v23, %v152
    %v157 = vsub.f32 %v26, %v153
    %v158 = vsub.f32 %v29, %v154
    %v159 = vsub.f32 %v32, %v155
    %v160 = vmul.f32 %v156, %v156
    %v161 = vmul.f32 %v157, %v157
    %v162 = vmul.f32 %v158, %v158
    %v163 = vmul.f32 %v159, %v159
    %168 = vrot.lane.b32.xlu0 %v160, 80
    %v169 = vpop.permute.xlu0 %168
    %170 = vrot.lane.b32.xlu0 %v161, 80
    %v171 = vpop.permute.xlu0 %170
    %172 = vrot.lane.b32.xlu0 %v162, 80
    %v173 = vpop.permute.xlu0 %172
    %174 = vrot.lane.b32.xlu0 %v163, 80
    %v175 = vpop.permute.xlu0 %174
    %v180 = vsel %vm35, %v169, 0.0
    %181 = vadd.xlane.f32.xlu0 %v180
    %v182 = vpop.xlane.xlu0 %181
    %v183 = vsel %vm35, %v171, 0.0
    %184 = vadd.xlane.f32.xlu0 %v183
    %v185 = vpop.xlane.xlu0 %184
    %v186 = vsel %vm35, %v173, 0.0
    %187 = vadd.xlane.f32.xlu0 %v186
    %v188 = vpop.xlane.xlu0 %187
    %v189 = vsel %vm35, %v175, 0.0
    %190 = vadd.xlane.f32.xlu0 %v189
    %v191 = vpop.xlane.xlu0 %190
    %v192 = vmul.f32 %v182, 0.021276595
    %v193 = vmul.f32 %v185, 0.021276595
    %v194 = vmul.f32 %v188, 0.021276595
    %v195 = vmul.f32 %v191, 0.021276595
    %v196 = vrsqrt.pop %v192
    %v197 = vmul.f32 %v192, %v196
    %vm198 = vcmp.eq.f32.partialorder %v192, inf
    %v199 = vsel %vm198, %v192, %v197
    %vm200 = vcmp.eq.f32.partialorder %v192, 0.0
    %v201 = vand.u32 %v192, 2147483648
    %v202 = vsel %vm200, %v201, %v199
    %v203 = vrsqrt.pop %v193
    %v204 = vmul.f32 %v193, %v203
    %vm205 = vcmp.eq.f32.partialorder %v193, inf
    %v206 = vsel %vm205, %v193, %v204
    %vm207 = vcmp.eq.f32.partialorder %v193, 0.0
    %v208 = vand.u32 %v193, 2147483648
    %v209 = vsel %vm207, %v208, %v206
    %v210 = vrsqrt.pop %v194
    %v211 = vmul.f32 %v194, %v210
    %vm212 = vcmp.eq.f32.partialorder %v194, inf
    %v213 = vsel %vm212, %v194, %v211
    %vm214 = vcmp.eq.f32.partialorder %v194, 0.0
    %v215 = vand.u32 %v194, 2147483648
    %v216 = vsel %vm214, %v215, %v213
    %v217 = vrsqrt.pop %v195
    %v218 = vmul.f32 %v195, %v217
    %vm219 = vcmp.eq.f32.partialorder %v195, inf
    %v220 = vsel %vm219, %v195, %v218
    %vm221 = vcmp.eq.f32.partialorder %v195, 0.0
    %v222 = vand.u32 %v195, 2147483648
    %v223 = vsel %vm221, %v222, %v220
    %v224 = vadd.f32 %v202, 1e-06
    %v225 = vadd.f32 %v209, 1e-06
    %v226 = vadd.f32 %v216, 1e-06
    %v227 = vadd.f32 %v223, 1e-06
    %v228 = vrcp.pop %v224
    %v229 = vmul.f32 1.0, %v228
    %v230 = vrcp.pop %v225
    %v231 = vmul.f32 1.0, %v230
    %v232 = vrcp.pop %v226
    %v233 = vmul.f32 1.0, %v232
    %v234 = vrcp.pop %v227
    %v235 = vmul.f32 1.0, %v234
    %v236 = vmul.f32 %v156, %v229
    %v237 = vmul.f32 %v157, %v231
    %v238 = vmul.f32 %v158, %v233
    %v239 = vmul.f32 %v159, %v235
    %vm240 = vcmask 785792
    %241 = vst.msk [vmem:[#allocation5] sm:$0xff] %vm240, %v236
    %242 = vst.msk [vmem:[#allocation5 + $0x18] sm:$0xff] %vm240, %v237
    %243 = vst.msk [vmem:[#allocation5 + $0x30] sm:$0xff] %vm240, %v238
    %244 = vst.msk [vmem:[#allocation5 + $0x48] sm:$0xff] %vm240, %v239
    %249 = vrot.lane.b32.xlu0 %v23, 32
    %v250 = vpop.permute.xlu0 %249
    %251 = vrot.lane.b32.xlu0 %v24, 32
    %v252 = vpop.permute.xlu0 %251
    %253 = vrot.lane.b32.xlu0 %v26, 32
    %v254 = vpop.permute.xlu0 %253
    %255 = vrot.lane.b32.xlu0 %v27, 32
    %v256 = vpop.permute.xlu0 %255
    %257 = vrot.lane.b32.xlu0 %v29, 32
    %v258 = vpop.permute.xlu0 %257
    %259 = vrot.lane.b32.xlu0 %v30, 32
    %v260 = vpop.permute.xlu0 %259
    %261 = vrot.lane.b32.xlu0 %v32, 32
    %v262 = vpop.permute.xlu0 %261
    %263 = vrot.lane.b32.xlu0 %v33, 32
    %v264 = vpop.permute.xlu0 %263
    %vm265 = vcmask 261120
    %v266 = vsel %vm265, %v250, %v252
    %v267 = vsel %vm265, %v254, %v256
    %v268 = vsel %vm265, %v258, %v260
    %v269 = vsel %vm265, %v262, %v264
    %v274 = vsel %vm35, %v266, 0.0
    %275 = vadd.xlane.f32.xlu0 %v274
    %v276 = vpop.xlane.xlu0 %275
    %v277 = vsel %vm35, %v267, 0.0
    %278 = vadd.xlane.f32.xlu0 %v277
    %v279 = vpop.xlane.xlu0 %278
    %v280 = vsel %vm35, %v268, 0.0
    %281 = vadd.xlane.f32.xlu0 %v280
    %v282 = vpop.xlane.xlu0 %281
    %v283 = vsel %vm35, %v269, 0.0
    %284 = vadd.xlane.f32.xlu0 %v283
    %v285 = vpop.xlane.xlu0 %284
    %v286 = vmul.f32 %v276, 0.020833334
    %v287 = vmul.f32 %v279, 0.020833334
    %v288 = vmul.f32 %v282, 0.020833334
    %v289 = vmul.f32 %v285, 0.020833334
    %v290 = vsub.f32 %v23, %v286
    %v291 = vsub.f32 %v24, %v286
    %v292 = vsub.f32 %v26, %v287
    %v293 = vsub.f32 %v27, %v287
    %v294 = vsub.f32 %v29, %v288
    %v295 = vsub.f32 %v30, %v288
    %v296 = vsub.f32 %v32, %v289
    %v297 = vsub.f32 %v33, %v289
    %v298 = vmul.f32 %v290, %v290
    %v299 = vmul.f32 %v291, %v291
    %v300 = vmul.f32 %v292, %v292
    %v301 = vmul.f32 %v293, %v293
    %v302 = vmul.f32 %v294, %v294
    %v303 = vmul.f32 %v295, %v295
    %v304 = vmul.f32 %v296, %v296
    %v305 = vmul.f32 %v297, %v297
    %314 = vrot.lane.b32.xlu0 %v298, 32
    %v315 = vpop.permute.xlu0 %314
    %316 = vrot.lane.b32.xlu0 %v299, 32
    %v317 = vpop.permute.xlu0 %316
    %318 = vrot.lane.b32.xlu0 %v300, 32
    %v319 = vpop.permute.xlu0 %318
    %320 = vrot.lane.b32.xlu0 %v301, 32
    %v321 = vpop.permute.xlu0 %320
    %322 = vrot.lane.b32.xlu0 %v302, 32
    %v323 = vpop.permute.xlu0 %322
    %324 = vrot.lane.b32.xlu0 %v303, 32
    %v325 = vpop.permute.xlu0 %324
    %326 = vrot.lane.b32.xlu0 %v304, 32
    %v327 = vpop.permute.xlu0 %326
    %328 = vrot.lane.b32.xlu0 %v305, 32
    %v329 = vpop.permute.xlu0 %328
    %v330 = vsel %vm265, %v315, %v317
    %v331 = vsel %vm265, %v319, %v321
    %v332 = vsel %vm265, %v323, %v325
    %v333 = vsel %vm265, %v327, %v329
    %v338 = vsel %vm35, %v330, 0.0
    %339 = vadd.xlane.f32.xlu0 %v338
    %v340 = vpop.xlane.xlu0 %339
    %v341 = vsel %vm35, %v331, 0.0
    %342 = vadd.xlane.f32.xlu0 %v341
    %v343 = vpop.xlane.xlu0 %342
    %v344 = vsel %vm35, %v332, 0.0
    %345 = vadd.xlane.f32.xlu0 %v344
    %v346 = vpop.xlane.xlu0 %345
    %v347 = vsel %vm35, %v333, 0.0
    %348 = vadd.xlane.f32.xlu0 %v347
    %v349 = vpop.xlane.xlu0 %348
    %v350 = vmul.f32 %v340, 0.021276595
    %v351 = vmul.f32 %v343, 0.021276595
    %v352 = vmul.f32 %v346, 0.021276595
    %v353 = vmul.f32 %v349, 0.021276595
    %v354 = vrsqrt.pop %v350
    %v355 = vmul.f32 %v350, %v354
    %vm356 = vcmp.eq.f32.partialorder %v350, inf
    %v357 = vsel %vm356, %v350, %v355
    %vm358 = vcmp.eq.f32.partialorder %v350, 0.0
    %v359 = vand.u32 %v350, 2147483648
    %v360 = vsel %vm358, %v359, %v357
    %v361 = vrsqrt.pop %v351
    %v362 = vmul.f32 %v351, %v361
    %vm363 = vcmp.eq.f32.partialorder %v351, inf
    %v364 = vsel %vm363, %v351, %v362
    %vm365 = vcmp.eq.f32.partialorder %v351, 0.0
    %v366 = vand.u32 %v351, 2147483648
    %v367 = vsel %vm365, %v366, %v364
    %v368 = vrsqrt.pop %v352
    %v369 = vmul.f32 %v352, %v368
    %vm370 = vcmp.eq.f32.partialorder %v352, inf
    %v371 = vsel %vm370, %v352, %v369
    %vm372 = vcmp.eq.f32.partialorder %v352, 0.0
    %v373 = vand.u32 %v352, 2147483648
    %v374 = vsel %vm372, %v373, %v371
    %v375 = vrsqrt.pop %v353
    %v376 = vmul.f32 %v353, %v375
    %vm377 = vcmp.eq.f32.partialorder %v353, inf
    %v378 = vsel %vm377, %v353, %v376
    %vm379 = vcmp.eq.f32.partialorder %v353, 0.0
    %v380 = vand.u32 %v353, 2147483648
    %v381 = vsel %vm379, %v380, %v378
    %v382 = vadd.f32 %v360, 1e-06
    %v383 = vadd.f32 %v367, 1e-06
    %v384 = vadd.f32 %v374, 1e-06
    %v385 = vadd.f32 %v381, 1e-06
    %v386 = vrcp.pop %v382
    %v387 = vmul.f32 1.0, %v386
    %v388 = vrcp.pop %v383
    %v389 = vmul.f32 1.0, %v388
    %v390 = vrcp.pop %v384
    %v391 = vmul.f32 1.0, %v390
    %v392 = vrcp.pop %v385
    %v393 = vmul.f32 1.0, %v392
    %v394 = vmul.f32 %v290, %v387
    %v395 = vmul.f32 %v291, %v387
    %v396 = vmul.f32 %v292, %v389
    %v397 = vmul.f32 %v293, %v389
    %v398 = vmul.f32 %v294, %v391
    %v399 = vmul.f32 %v295, %v391
    %v400 = vmul.f32 %v296, %v393
    %v401 = vmul.f32 %v297, %v393
    %vm402 = vcmask 1048320
    %403 = vst.msk [vmem:[#allocation5] sm:$0xff] %vm402, %v394
    %vm404 = vcmask 130048
    %405 = vst.msk [vmem:[#allocation5 + $0x8] sm:$0xff] %vm404, %v395
    %406 = vst.msk [vmem:[#allocation5 + $0x18] sm:$0xff] %vm402, %v396
    %407 = vst.msk [vmem:[#allocation5 + $0x20] sm:$0xff] %vm404, %v397
    %408 = vst.msk [vmem:[#allocation5 + $0x30] sm:$0xff] %vm402, %v398
    %409 = vst.msk [vmem:[#allocation5 + $0x38] sm:$0xff] %vm404, %v399
    %410 = vst.msk [vmem:[#allocation5 + $0x48] sm:$0xff] %vm402, %v400
    %411 = vst.msk [vmem:[#allocation5 + $0x50] sm:$0xff] %vm404, %v401
    %412 = vrot.lane.b32.xlu0 %v24, 112
    %v413 = vpop.permute.xlu0 %412
    %414 = vrot.lane.b32.xlu0 %v27, 112
    %v415 = vpop.permute.xlu0 %414
    %416 = vrot.lane.b32.xlu0 %v30, 112
    %v417 = vpop.permute.xlu0 %416
    %418 = vrot.lane.b32.xlu0 %v33, 112
    %v419 = vpop.permute.xlu0 %418
    %v424 = vsel %vm35, %v413, 0.0
    %425 = vadd.xlane.f32.xlu0 %v424
    %v426 = vpop.xlane.xlu0 %425
    %v427 = vsel %vm35, %v415, 0.0
    %428 = vadd.xlane.f32.xlu0 %v427
    %v429 = vpop.xlane.xlu0 %428
    %v430 = vsel %vm35, %v417, 0.0
    %431 = vadd.xlane.f32.xlu0 %v430
    %v432 = vpop.xlane.xlu0 %431
    %v433 = vsel %vm35, %v419, 0.0
    %434 = vadd.xlane.f32.xlu0 %v433
    %v435 = vpop.xlane.xlu0 %434
    %v436 = vmul.f32 %v426, 0.020833334
    %v437 = vmul.f32 %v429, 0.020833334
    %v438 = vmul.f32 %v432, 0.020833334
    %v439 = vmul.f32 %v435, 0.020833334
    %v440 = vsub.f32 %v24, %v436
    %v441 = vsub.f32 %v27, %v437
    %v442 = vsub.f32 %v30, %v438
    %v443 = vsub.f32 %v33, %v439
    %v444 = vmul.f32 %v440, %v440
    %v445 = vmul.f32 %v441, %v441
    %v446 = vmul.f32 %v442, %v442
    %v447 = vmul.f32 %v443, %v443
    %452 = vrot.lane.b32.xlu0 %v444, 112
    %v453 = vpop.permute.xlu0 %452
    %454 = vrot.lane.b32.xlu0 %v445, 112
    %v455 = vpop.permute.xlu0 %454
    %456 = vrot.lane.b32.xlu0 %v446, 112
    %v457 = vpop.permute.xlu0 %456
    %458 = vrot.lane.b32.xlu0 %v447, 112
    %v459 = vpop.permute.xlu0 %458
    %v464 = vsel %vm35, %v453, 0.0
    %465 = vadd.xlane.f32.xlu0 %v464
    %v466 = vpop.xlane.xlu0 %465
    %v467 = vsel %vm35, %v455, 0.0
    %468 = vadd.xlane.f32.xlu0 %v467
    %v469 = vpop.xlane.xlu0 %468
    %v470 = vsel %vm35, %v457, 0.0
    %471 = vadd.xlane.f32.xlu0 %v470
    %v472 = vpop.xlane.xlu0 %471
    %v473 = vsel %vm35, %v459, 0.0
    %474 = vadd.xlane.f32.xlu0 %v473
    %v475 = vpop.xlane.xlu0 %474
    %v476 = vmul.f32 %v466, 0.021276595
    %v477 = vmul.f32 %v469, 0.021276595
    %v478 = vmul.f32 %v472, 0.021276595
    %v479 = vmul.f32 %v475, 0.021276595
    %v480 = vrsqrt.pop %v476
    %v481 = vmul.f32 %v476, %v480
    %vm482 = vcmp.eq.f32.partialorder %v476, inf
    %v483 = vsel %vm482, %v476, %v481
    %vm484 = vcmp.eq.f32.partialorder %v476, 0.0
    %v485 = vand.u32 %v476, 2147483648
    %v486 = vsel %vm484, %v485, %v483
    %v487 = vrsqrt.pop %v477
    %v488 = vmul.f32 %v477, %v487
    %vm489 = vcmp.eq.f32.partialorder %v477, inf
    %v490 = vsel %vm489, %v477, %v488
    %vm491 = vcmp.eq.f32.partialorder %v477, 0.0
    %v492 = vand.u32 %v477, 2147483648
    %v493 = vsel %vm491, %v492, %v490
    %v494 = vrsqrt.pop %v478
    %v495 = vmul.f32 %v478, %v494
    %vm496 = vcmp.eq.f32.partialorder %v478, inf
    %v497 = vsel %vm496, %v478, %v495
    %vm498 = vcmp.eq.f32.partialorder %v478, 0.0
    %v499 = vand.u32 %v478, 2147483648
    %v500 = vsel %vm498, %v499, %v497
    %v501 = vrsqrt.pop %v479
    %v502 = vmul.f32 %v479, %v501
    %vm503 = vcmp.eq.f32.partialorder %v479, inf
    %v504 = vsel %vm503, %v479, %v502
    %vm505 = vcmp.eq.f32.partialorder %v479, 0.0
    %v506 = vand.u32 %v479, 2147483648
    %v507 = vsel %vm505, %v506, %v504
    %v508 = vadd.f32 %v486, 1e-06
    %v509 = vadd.f32 %v493, 1e-06
    %v510 = vadd.f32 %v500, 1e-06
    %v511 = vadd.f32 %v507, 1e-06
    %v512 = vrcp.pop %v508
    %v513 = vmul.f32 1.0, %v512
    %v514 = vrcp.pop %v509
    %v515 = vmul.f32 1.0, %v514
    %v516 = vrcp.pop %v510
    %v517 = vmul.f32 1.0, %v516
    %v518 = vrcp.pop %v511
    %v519 = vmul.f32 1.0, %v518
    %v520 = vmul.f32 %v440, %v513
    %v521 = vmul.f32 %v441, %v515
    %v522 = vmul.f32 %v442, %v517
    %v523 = vmul.f32 %v443, %v519
    %vm524 = vcmask 523392
    %525 = vst.msk [vmem:[#allocation5 + $0x8] sm:$0xff] %vm524, %v520
    %526 = vst.msk [vmem:[#allocation5 + $0x20] sm:$0xff] %vm524, %v521
    %527 = vst.msk [vmem:[#allocation5 + $0x38] sm:$0xff] %vm524, %v522
    %528 = vst.msk [vmem:[#allocation5 + $0x50] sm:$0xff] %vm524, %v523
    %529 = vrot.lane.b32.xlu0 %v24, 64
    %v530 = vpop.permute.xlu0 %529
    %531 = vrot.lane.b32.xlu0 %v27, 64
    %v532 = vpop.permute.xlu0 %531
    %533 = vrot.lane.b32.xlu0 %v30, 64
    %v534 = vpop.permute.xlu0 %533
    %535 = vrot.lane.b32.xlu0 %v33, 64
    %v536 = vpop.permute.xlu0 %535
    %v541 = vsel %vm35, %v530, 0.0
    %542 = vadd.xlane.f32.xlu0 %v541
    %v543 = vpop.xlane.xlu0 %542
    %v544 = vsel %vm35, %v532, 0.0
    %545 = vadd.xlane.f32.xlu0 %v544
    %v546 = vpop.xlane.xlu0 %545
    %v547 = vsel %vm35, %v534, 0.0
    %548 = vadd.xlane.f32.xlu0 %v547
    %v549 = vpop.xlane.xlu0 %548
    %v550 = vsel %vm35, %v536, 0.0
    %551 = vadd.xlane.f32.xlu0 %v550
    %v552 = vpop.xlane.xlu0 %551
    %v553 = vmul.f32 %v543, 0.020833334
    %v554 = vmul.f32 %v546, 0.020833334
    %v555 = vmul.f32 %v549, 0.020833334
    %v556 = vmul.f32 %v552, 0.020833334
    %v557 = vsub.f32 %v24, %v553
    %v558 = vsub.f32 %v27, %v554
    %v559 = vsub.f32 %v30, %v555
    %v560 = vsub.f32 %v33, %v556
    %v561 = vmul.f32 %v557, %v557
    %v562 = vmul.f32 %v558, %v558
    %v563 = vmul.f32 %v559, %v559
    %v564 = vmul.f32 %v560, %v560
    %569 = vrot.lane.b32.xlu0 %v561, 64
    %v570 = vpop.permute.xlu0 %569
    %571 = vrot.lane.b32.xlu0 %v562, 64
    %v572 = vpop.permute.xlu0 %571
    %573 = vrot.lane.b32.xlu0 %v563, 64
    %v574 = vpop.permute.xlu0 %573
    %575 = vrot.lane.b32.xlu0 %v564, 64
    %v576 = vpop.permute.xlu0 %575
    %v581 = vsel %vm35, %v570, 0.0
    %582 = vadd.xlane.f32.xlu0 %v581
    %v583 = vpop.xlane.xlu0 %582
    %v584 = vsel %vm35, %v572, 0.0
    %585 = vadd.xlane.f32.xlu0 %v584
    %v586 = vpop.xlane.xlu0 %585
    %v587 = vsel %vm35, %v574, 0.0
    %588 = vadd.xlane.f32.xlu0 %v587
    %v589 = vpop.xlane.xlu0 %588
    %v590 = vsel %vm35, %v576, 0.0
    %591 = vadd.xlane.f32.xlu0 %v590
    %v592 = vpop.xlane.xlu0 %591
    %v593 = vmul.f32 %v583, 0.021276595
    %v594 = vmul.f32 %v586, 0.021276595
    %v595 = vmul.f32 %v589, 0.021276595
    %v596 = vmul.f32 %v592, 0.021276595
    %v597 = vrsqrt.pop %v593
    %v598 = vmul.f32 %v593, %v597
    %vm599 = vcmp.eq.f32.partialorder %v593, inf
    %v600 = vsel %vm599, %v593, %v598
    %vm601 = vcmp.eq.f32.partialorder %v593, 0.0
    %v602 = vand.u32 %v593, 2147483648
    %v603 = vsel %vm601, %v602, %v600
    %v604 = vrsqrt.pop %v594
    %v605 = vmul.f32 %v594, %v604
    %vm606 = vcmp.eq.f32.partialorder %v594, inf
    %v607 = vsel %vm606, %v594, %v605
    %vm608 = vcmp.eq.f32.partialorder %v594, 0.0
    %v609 = vand.u32 %v594, 2147483648
    %v610 = vsel %vm608, %v609, %v607
    %v611 = vrsqrt.pop %v595
    %v612 = vmul.f32 %v595, %v611
    %vm613 = vcmp.eq.f32.partialorder %v595, inf
    %v614 = vsel %vm613, %v595, %v612
    %vm615 = vcmp.eq.f32.partialorder %v595, 0.0
    %v616 = vand.u32 %v595, 2147483648
    %v617 = vsel %vm615, %v616, %v614
    %v618 = vrsqrt.pop %v596
    %v619 = vmul.f32 %v596, %v618
    %vm620 = vcmp.eq.f32.partialorder %v596, inf
    %v621 = vsel %vm620, %v596, %v619
    %vm622 = vcmp.eq.f32.partialorder %v596, 0.0
    %v623 = vand.u32 %v596, 2147483648
    %v624 = vsel %vm622, %v623, %v621
    %v625 = vadd.f32 %v603, 1e-06
    %v626 = vadd.f32 %v610, 1e-06
    %v627 = vadd.f32 %v617, 1e-06
    %v628 = vadd.f32 %v624, 1e-06
    %v629 = vrcp.pop %v625
    %v630 = vmul.f32 1.0, %v629
    %v631 = vrcp.pop %v626
    %v632 = vmul.f32 1.0, %v631
    %v633 = vrcp.pop %v627
    %v634 = vmul.f32 1.0, %v633
    %v635 = vrcp.pop %v628
    %v636 = vmul.f32 1.0, %v635
    %v637 = vmul.f32 %v557, %v630
    %v638 = vmul.f32 %v558, %v632
    %v639 = vmul.f32 %v559, %v634
    %v640 = vmul.f32 %v560, %v636
    %vm641 = vcmask 916992
    %642 = vst.msk [vmem:[#allocation5 + $0x8] sm:$0xff] %vm641, %v637
    %643 = vst.msk [vmem:[#allocation5 + $0x20] sm:$0xff] %vm641, %v638
    %644 = vst.msk [vmem:[#allocation5 + $0x38] sm:$0xff] %vm641, %v639
    %645 = vst.msk [vmem:[#allocation5 + $0x50] sm:$0xff] %vm641, %v640
    %650 = vrot.lane.b32.xlu0 %v24, 16
    %v651 = vpop.permute.xlu0 %650
    %652 = vrot.lane.b32.xlu0 %v25, 16
    %v653 = vpop.permute.xlu0 %652
    %654 = vrot.lane.b32.xlu0 %v27, 16
    %v655 = vpop.permute.xlu0 %654
    %656 = vrot.lane.b32.xlu0 %v28, 16
    %v657 = vpop.permute.xlu0 %656
    %658 = vrot.lane.b32.xlu0 %v30, 16
    %v659 = vpop.permute.xlu0 %658
    %660 = vrot.lane.b32.xlu0 %v31, 16
    %v661 = vpop.permute.xlu0 %660
    %662 = vrot.lane.b32.xlu0 %v33, 16
    %v663 = vpop.permute.xlu0 %662
    %664 = vrot.lane.b32.xlu0 %v34, 16
    %v665 = vpop.permute.xlu0 %664
    %v666 = vsel %vm404, %v651, %v653
    %v667 = vsel %vm404, %v655, %v657
    %v668 = vsel %vm404, %v659, %v661
    %v669 = vsel %vm404, %v663, %v665
    %v674 = vsel %vm35, %v666, 0.0
    %675 = vadd.xlane.f32.xlu0 %v674
    %v676 = vpop.xlane.xlu0 %675
    %v677 = vsel %vm35, %v667, 0.0
    %678 = vadd.xlane.f32.xlu0 %v677
    %v679 = vpop.xlane.xlu0 %678
    %v680 = vsel %vm35, %v668, 0.0
    %681 = vadd.xlane.f32.xlu0 %v680
    %v682 = vpop.xlane.xlu0 %681
    %v683 = vsel %vm35, %v669, 0.0
    %684 = vadd.xlane.f32.xlu0 %v683
    %v685 = vpop.xlane.xlu0 %684
    %v686 = vmul.f32 %v676, 0.020833334
    %v687 = vmul.f32 %v679, 0.020833334
    %v688 = vmul.f32 %v682, 0.020833334
    %v689 = vmul.f32 %v685, 0.020833334
    %v690 = vsub.f32 %v24, %v686
    %v691 = vsub.f32 %v25, %v686
    %v692 = vsub.f32 %v27, %v687
    %v693 = vsub.f32 %v28, %v687
    %v694 = vsub.f32 %v30, %v688
    %v695 = vsub.f32 %v31, %v688
    %v696 = vsub.f32 %v33, %v689
    %v697 = vsub.f32 %v34, %v689
    %v698 = vmul.f32 %v690, %v690
    %v699 = vmul.f32 %v691, %v691
    %v700 = vmul.f32 %v692, %v692
    %v701 = vmul.f32 %v693, %v693
    %v702 = vmul.f32 %v694, %v694
    %v703 = vmul.f32 %v695, %v695
    %v704 = vmul.f32 %v696, %v696
    %v705 = vmul.f32 %v697, %v697
    %714 = vrot.lane.b32.xlu0 %v698, 16
    %v715 = vpop.permute.xlu0 %714
    %716 = vrot.lane.b32.xlu0 %v699, 16
    %v717 = vpop.permute.xlu0 %716
    %718 = vrot.lane.b32.xlu0 %v700, 16
    %v719 = vpop.permute.xlu0 %718
    %720 = vrot.lane.b32.xlu0 %v701, 16
    %v721 = vpop.permute.xlu0 %720
    %722 = vrot.lane.b32.xlu0 %v702, 16
    %v723 = vpop.permute.xlu0 %722
    %724 = vrot.lane.b32.xlu0 %v703, 16
    %v725 = vpop.permute.xlu0 %724
    %726 = vrot.lane.b32.xlu0 %v704, 16
    %v727 = vpop.permute.xlu0 %726
    %728 = vrot.lane.b32.xlu0 %v705, 16
    %v729 = vpop.permute.xlu0 %728
    %v730 = vsel %vm404, %v715, %v717
    %v731 = vsel %vm404, %v719, %v721
    %v732 = vsel %vm404, %v723, %v725
    %v733 = vsel %vm404, %v727, %v729
    %v738 = vsel %vm35, %v730, 0.0
    %739 = vadd.xlane.f32.xlu0 %v738
    %v740 = vpop.xlane.xlu0 %739
    %v741 = vsel %vm35, %v731, 0.0
    %742 = vadd.xlane.f32.xlu0 %v741
    %v743 = vpop.xlane.xlu0 %742
    %v744 = vsel %vm35, %v732, 0.0
    %745 = vadd.xlane.f32.xlu0 %v744
    %v746 = vpop.xlane.xlu0 %745
    %v747 = vsel %vm35, %v733, 0.0
    %748 = vadd.xlane.f32.xlu0 %v747
    %v749 = vpop.xlane.xlu0 %748
    %v750 = vmul.f32 %v740, 0.021276595
    %v751 = vmul.f32 %v743, 0.021276595
    %v752 = vmul.f32 %v746, 0.021276595
    %v753 = vmul.f32 %v749, 0.021276595
    %v754 = vrsqrt.pop %v750
    %v755 = vmul.f32 %v750, %v754
    %vm756 = vcmp.eq.f32.partialorder %v750, inf
    %v757 = vsel %vm756, %v750, %v755
    %vm758 = vcmp.eq.f32.partialorder %v750, 0.0
    %v759 = vand.u32 %v750, 2147483648
    %v760 = vsel %vm758, %v759, %v757
    %v761 = vrsqrt.pop %v751
    %v762 = vmul.f32 %v751, %v761
    %vm763 = vcmp.eq.f32.partialorder %v751, inf
    %v764 = vsel %vm763, %v751, %v762
    %vm765 = vcmp.eq.f32.partialorder %v751, 0.0
    %v766 = vand.u32 %v751, 2147483648
    %v767 = vsel %vm765, %v766, %v764
    %v768 = vrsqrt.pop %v752
    %v769 = vmul.f32 %v752, %v768
    %vm770 = vcmp.eq.f32.partialorder %v752, inf
    %v771 = vsel %vm770, %v752, %v769
    %vm772 = vcmp.eq.f32.partialorder %v752, 0.0
    %v773 = vand.u32 %v752, 2147483648
    %v774 = vsel %vm772, %v773, %v771
    %v775 = vrsqrt.pop %v753
    %v776 = vmul.f32 %v753, %v775
    %vm777 = vcmp.eq.f32.partialorder %v753, inf
    %v778 = vsel %vm777, %v753, %v776
    %vm779 = vcmp.eq.f32.partialorder %v753, 0.0
    %v780 = vand.u32 %v753, 2147483648
    %v781 = vsel %vm779, %v780, %v778
    %v782 = vadd.f32 %v760, 1e-06
    %v783 = vadd.f32 %v767, 1e-06
    %v784 = vadd.f32 %v774, 1e-06
    %v785 = vadd.f32 %v781, 1e-06
    %v786 = vrcp.pop %v782
    %v787 = vmul.f32 1.0, %v786
    %v788 = vrcp.pop %v783
    %v789 = vmul.f32 1.0, %v788
    %v790 = vrcp.pop %v784
    %v791 = vmul.f32 1.0, %v790
    %v792 = vrcp.pop %v785
    %v793 = vmul.f32 1.0, %v792
    %v794 = vmul.f32 %v690, %v787
    %v795 = vmul.f32 %v691, %v787
    %v796 = vmul.f32 %v692, %v789
    %v797 = vmul.f32 %v693, %v789
    %v798 = vmul.f32 %v694, %v791
    %v799 = vmul.f32 %v695, %v791
    %v800 = vmul.f32 %v696, %v793
    %v801 = vmul.f32 %v697, %v793
    %vm802 = vcmask 1048448
    %803 = vst.msk [vmem:[#allocation5 + $0x8] sm:$0xff] %vm802, %v794
    %804 = vst.msk [vmem:[#allocation5 + $0x10] sm:$0xff] %vm265, %v795
    %805 = vst.msk [vmem:[#allocation5 + $0x20] sm:$0xff] %vm802, %v796
    %806 = vst.msk [vmem:[#allocation5 + $0x28] sm:$0xff] %vm265, %v797
    %807 = vst.msk [vmem:[#allocation5 + $0x38] sm:$0xff] %vm802, %v798
    %808 = vst.msk [vmem:[#allocation5 + $0x40] sm:$0xff] %vm265, %v799
    %809 = vst.msk [vmem:[#allocation5 + $0x50] sm:$0xff] %vm802, %v800
    %810 = vst.msk [vmem:[#allocation5 + $0x58] sm:$0xff] %vm265, %v801
    %811 = vrot.lane.b32.xlu0 %v25, 96
    %v812 = vpop.permute.xlu0 %811
    %813 = vrot.lane.b32.xlu0 %v28, 96
    %v814 = vpop.permute.xlu0 %813
    %815 = vrot.lane.b32.xlu0 %v31, 96
    %v816 = vpop.permute.xlu0 %815
    %817 = vrot.lane.b32.xlu0 %v34, 96
    %v818 = vpop.permute.xlu0 %817
    %v823 = vsel %vm35, %v812, 0.0
    %824 = vadd.xlane.f32.xlu0 %v823
    %v825 = vpop.xlane.xlu0 %824
    %v826 = vsel %vm35, %v814, 0.0
    %827 = vadd.xlane.f32.xlu0 %v826
    %v828 = vpop.xlane.xlu0 %827
    %v829 = vsel %vm35, %v816, 0.0
    %830 = vadd.xlane.f32.xlu0 %v829
    %v831 = vpop.xlane.xlu0 %830
    %v832 = vsel %vm35, %v818, 0.0
    %833 = vadd.xlane.f32.xlu0 %v832
    %v834 = vpop.xlane.xlu0 %833
    %v835 = vmul.f32 %v825, 0.020833334
    %v836 = vmul.f32 %v828, 0.020833334
    %v837 = vmul.f32 %v831, 0.020833334
    %v838 = vmul.f32 %v834, 0.020833334
    %v839 = vsub.f32 %v25, %v835
    %v840 = vsub.f32 %v28, %v836
    %v841 = vsub.f32 %v31, %v837
    %v842 = vsub.f32 %v34, %v838
    %v843 = vmul.f32 %v839, %v839
    %v844 = vmul.f32 %v840, %v840
    %v845 = vmul.f32 %v841, %v841
    %v846 = vmul.f32 %v842, %v842
    %851 = vrot.lane.b32.xlu0 %v843, 96
    %v852 = vpop.permute.xlu0 %851
    %853 = vrot.lane.b32.xlu0 %v844, 96
    %v854 = vpop.permute.xlu0 %853
    %855 = vrot.lane.b32.xlu0 %v845, 96
    %v856 = vpop.permute.xlu0 %855
    %857 = vrot.lane.b32.xlu0 %v846, 96
    %v858 = vpop.permute.xlu0 %857
    %v863 = vsel %vm35, %v852, 0.0
    %864 = vadd.xlane.f32.xlu0 %v863
    %v865 = vpop.xlane.xlu0 %864
    %v866 = vsel %vm35, %v854, 0.0
    %867 = vadd.xlane.f32.xlu0 %v866
    %v868 = vpop.xlane.xlu0 %867
    %v869 = vsel %vm35, %v856, 0.0
    %870 = vadd.xlane.f32.xlu0 %v869
    %v871 = vpop.xlane.xlu0 %870
    %v872 = vsel %vm35, %v858, 0.0
    %873 = vadd.xlane.f32.xlu0 %v872
    %v874 = vpop.xlane.xlu0 %873
    %v875 = vmul.f32 %v865, 0.021276595
    %v876 = vmul.f32 %v868, 0.021276595
    %v877 = vmul.f32 %v871, 0.021276595
    %v878 = vmul.f32 %v874, 0.021276595
    %v879 = vrsqrt.pop %v875
    %v880 = vmul.f32 %v875, %v879
    %vm881 = vcmp.eq.f32.partialorder %v875, inf
    %v882 = vsel %vm881, %v875, %v880
    %vm883 = vcmp.eq.f32.partialorder %v875, 0.0
    %v884 = vand.u32 %v875, 2147483648
    %v885 = vsel %vm883, %v884, %v882
    %v886 = vrsqrt.pop %v876
    %v887 = vmul.f32 %v876, %v886
    %vm888 = vcmp.eq.f32.partialorder %v876, inf
    %v889 = vsel %vm888, %v876, %v887
    %vm890 = vcmp.eq.f32.partialorder %v876, 0.0
    %v891 = vand.u32 %v876, 2147483648
    %v892 = vsel %vm890, %v891, %v889
    %v893 = vrsqrt.pop %v877
    %v894 = vmul.f32 %v877, %v893
    %vm895 = vcmp.eq.f32.partialorder %v877, inf
    %v896 = vsel %vm895, %v877, %v894
    %vm897 = vcmp.eq.f32.partialorder %v877, 0.0
    %v898 = vand.u32 %v877, 2147483648
    %v899 = vsel %vm897, %v898, %v896
    %v900 = vrsqrt.pop %v878
    %v901 = vmul.f32 %v878, %v900
    %vm902 = vcmp.eq.f32.partialorder %v878, inf
    %v903 = vsel %vm902, %v878, %v901
    %vm904 = vcmp.eq.f32.partialorder %v878, 0.0
    %v905 = vand.u32 %v878, 2147483648
    %v906 = vsel %vm904, %v905, %v903
    %v907 = vadd.f32 %v885, 1e-06
    %v908 = vadd.f32 %v892, 1e-06
    %v909 = vadd.f32 %v899, 1e-06
    %v910 = vadd.f32 %v906, 1e-06
    %v911 = vrcp.pop %v907
    %v912 = vmul.f32 1.0, %v911
    %v913 = vrcp.pop %v908
    %v914 = vmul.f32 1.0, %v913
    %v915 = vrcp.pop %v909
    %v916 = vmul.f32 1.0, %v915
    %v917 = vrcp.pop %v910
    %v918 = vmul.f32 1.0, %v917
    %v919 = vmul.f32 %v839, %v912
    %v920 = vmul.f32 %v840, %v914
    %v921 = vmul.f32 %v841, %v916
    %v922 = vmul.f32 %v842, %v918
    %vm923 = vcmask 654592
    %924 = vst.msk [vmem:[#allocation5 + $0x10] sm:$0xff] %vm923, %v919
    %925 = vst.msk [vmem:[#allocation5 + $0x28] sm:$0xff] %vm923, %v920
    %926 = vst.msk [vmem:[#allocation5 + $0x40] sm:$0xff] %vm923, %v921
    %927 = vst.msk [vmem:[#allocation5 + $0x58] sm:$0xff] %vm923, %v922
    %928 = vrot.lane.b32.xlu0 %v25, 48
    %v929 = vpop.permute.xlu0 %928
    %930 = vrot.lane.b32.xlu0 %v28, 48
    %v931 = vpop.permute.xlu0 %930
    %932 = vrot.lane.b32.xlu0 %v31, 48
    %v933 = vpop.permute.xlu0 %932
    %934 = vrot.lane.b32.xlu0 %v34, 48
    %v935 = vpop.permute.xlu0 %934
    %v940 = vsel %vm35, %v929, 0.0
    %941 = vadd.xlane.f32.xlu0 %v940
    %v942 = vpop.xlane.xlu0 %941
    %v943 = vsel %vm35, %v931, 0.0
    %944 = vadd.xlane.f32.xlu0 %v943
    %v945 = vpop.xlane.xlu0 %944
    %v946 = vsel %vm35, %v933, 0.0
    %947 = vadd.xlane.f32.xlu0 %v946
    %v948 = vpop.xlane.xlu0 %947
    %v949 = vsel %vm35, %v935, 0.0
    %950 = vadd.xlane.f32.xlu0 %v949
    %v951 = vpop.xlane.xlu0 %950
    %v952 = vmul.f32 %v942, 0.020833334
    %v953 = vmul.f32 %v945, 0.020833334
    %v954 = vmul.f32 %v948, 0.020833334
    %v955 = vmul.f32 %v951, 0.020833334
    %v956 = vsub.f32 %v25, %v952
    %v957 = vsub.f32 %v28, %v953
    %v958 = vsub.f32 %v31, %v954
    %v959 = vsub.f32 %v34, %v955
    %v960 = vmul.f32 %v956, %v956
    %v961 = vmul.f32 %v957, %v957
    %v962 = vmul.f32 %v958, %v958
    %v963 = vmul.f32 %v959, %v959
    %968 = vrot.lane.b32.xlu0 %v960, 48
    %v969 = vpop.permute.xlu0 %968
    %970 = vrot.lane.b32.xlu0 %v961, 48
    %v971 = vpop.permute.xlu0 %970
    %972 = vrot.lane.b32.xlu0 %v962, 48
    %v973 = vpop.permute.xlu0 %972
    %974 = vrot.lane.b32.xlu0 %v963, 48
    %v975 = vpop.permute.xlu0 %974
    %v980 = vsel %vm35, %v969, 0.0
    %981 = vadd.xlane.f32.xlu0 %v980
    %v982 = vpop.xlane.xlu0 %981
    %v983 = vsel %vm35, %v971, 0.0
    %984 = vadd.xlane.f32.xlu0 %v983
    %v985 = vpop.xlane.xlu0 %984
    %v986 = vsel %vm35, %v973, 0.0
    %987 = vadd.xlane.f32.xlu0 %v986
    %v988 = vpop.xlane.xlu0 %987
    %v989 = vsel %vm35, %v975, 0.0
    %990 = vadd.xlane.f32.xlu0 %v989
    %v991 = vpop.xlane.xlu0 %990
    %v992 = vmul.f32 %v982, 0.021276595
    %v993 = vmul.f32 %v985, 0.021276595
    %v994 = vmul.f32 %v988, 0.021276595
    %v995 = vmul.f32 %v991, 0.021276595
    %v996 = vrsqrt.pop %v992
    %v997 = vmul.f32 %v992, %v996
    %vm998 = vcmp.eq.f32.partialorder %v992, inf
    %v999 = vsel %vm998, %v992, %v997
    %vm1000 = vcmp.eq.f32.partialorder %v992, 0.0
    %v1001 = vand.u32 %v992, 2147483648
    %v1002 = vsel %vm1000, %v1001, %v999
    %v1003 = vrsqrt.pop %v993
    %v1004 = vmul.f32 %v993, %v1003
    %vm1005 = vcmp.eq.f32.partialorder %v993, inf
    %v1006 = vsel %vm1005, %v993, %v1004
    %vm1007 = vcmp.eq.f32.partialorder %v993, 0.0
    %v1008 = vand.u32 %v993, 2147483648
    %v1009 = vsel %vm1007, %v1008, %v1006
    %v1010 = vrsqrt.pop %v994
    %v1011 = vmul.f32 %v994, %v1010
    %vm1012 = vcmp.eq.f32.partialorder %v994, inf
    %v1013 = vsel %vm1012, %v994, %v1011
    %vm1014 = vcmp.eq.f32.partialorder %v994, 0.0
    %v1015 = vand.u32 %v994, 2147483648
    %v1016 = vsel %vm1014, %v1015, %v1013
    %v1017 = vrsqrt.pop %v995
    %v1018 = vmul.f32 %v995, %v1017
    %vm1019 = vcmp.eq.f32.partialorder %v995, inf
    %v1020 = vsel %vm1019, %v995, %v1018
    %vm1021 = vcmp.eq.f32.partialorder %v995, 0.0
    %v1022 = vand.u32 %v995, 2147483648
    %v1023 = vsel %vm1021, %v1022, %v1020
    %v1024 = vadd.f32 %v1002, 1e-06
    %v1025 = vadd.f32 %v1009, 1e-06
    %v1026 = vadd.f32 %v1016, 1e-06
    %v1027 = vadd.f32 %v1023, 1e-06
    %v1028 = vrcp.pop %v1024
    %v1029 = vmul.f32 1.0, %v1028
    %v1030 = vrcp.pop %v1025
    %v1031 = vmul.f32 1.0, %v1030
    %v1032 = vrcp.pop %v1026
    %v1033 = vmul.f32 1.0, %v1032
    %v1034 = vrcp.pop %v1027
    %v1035 = vmul.f32 1.0, %v1034
    %v1036 = vmul.f32 %v956, %v1029
    %v1037 = vmul.f32 %v957, %v1031
    %v1038 = vmul.f32 %v958, %v1033
    %v1039 = vmul.f32 %v959, %v1035
    %vm1040 = vcmask 1048192
    %1041 = vst.msk [vmem:[#allocation5 + $0x10] sm:$0xff] %vm1040, %v1036
    %1042 = vst.msk [vmem:[#allocation5 + $0x28] sm:$0xff] %vm1040, %v1037
    %1043 = vst.msk [vmem:[#allocation5 + $0x40] sm:$0xff] %vm1040, %v1038
    %1044 = vst.msk [vmem:[#allocation5 + $0x58] sm:$0xff] %vm1040, %v1039
    // Predicated region
    $region10: #{tpu_custom_call.1} parent=1 // pred_check
      _
    $region11: #{tpu_custom_call.1} parent=1 // pred_check_branch
      %1046 = sbr.rel (0) target = $region13
    $region12: #{tpu_custom_call.1} parent=1 // pred_region
      %s1048 = ssub.s32 1536, 1536
      %1049 = vsyncadd [#allocation4], %s1048
      %s1050 = sshll.u32 [#allocation5], 4
      %s1051 = int_to_ptr.vmem [resolvable:$true] %s1050
      %1056 = dma.vmem_to_hbm [thread:$0]  %s1051, 1536, %s1, [#allocation4], 384, 384, 24
    $region13: #{tpu_custom_call.1} parent=1 // pred_fallthru
      _
    // Predicated region
    $region14: #{tpu_custom_call.1} parent=1 // pred_check
      _
    $region15: #{tpu_custom_call.1} parent=1 // pred_check_branch
      %1058 = sbr.rel (0) target = $region17
    $region16: #{tpu_custom_call.1} parent=1 // pred_region
      %1059 = dma.done [#allocation4], 1536
    $region17: #{tpu_custom_call.1} parent=1 // pred_fallthru
      _
    %1060 = vsyncpa [#allocation3], 1
    %1061 = vsyncpa [#allocation4], 1

</llo_original>
